<compile_context>
chip_gen: v6e
topology: v6e:2x2x1
jax: 0.10.0
libtpu: 0.0.40
codegen_flags: <defaults>
</compile_context>

<pallas_src>
import functools

import jax
import jax.numpy as jnp
from jax.experimental import pallas as pl
from jax.experimental.pallas import tpu as pltpu

EPS = 1e-5  # nn.LayerNorm default eps


def _layernorm(x, gamma, beta):
    mean = jnp.mean(x, axis=-1, keepdims=True)
    var = jnp.mean((x - mean) ** 2, axis=-1, keepdims=True)
    return (x - mean) * jax.lax.rsqrt(var + EPS) * gamma + beta


def _silu(x):
    return x * jax.nn.sigmoid(x)


# ----------------------------- fused kernel ---------------------------------
def gnnlf_kernel(
        # inputs
        s_ref, ef_ref, gamma_ref, beta_ref,
        wqkv_ref, bqkv_ref, hmask_ref, wso_ref, bso_ref, amask_ref, wvec_ref,
        # outputs
        dx_ref, dvec_ref,
        # scratch
        s1_sc, s2_sc, o1_sc, o2_sc, o3_sc, acc_sc,
        *, H, mm_dtype):
    i = pl.program_id(1)

    gamma = gamma_ref[...]                       # (1, H)
    beta = beta_ref[...]                         # (1, H)

    # ---- node math: once per batch element (first N_i tile) ----------------
    @pl.when(i == 0)
    def _node_and_init():
        x = s_ref[...]                           # (N, H)
        xn = _layernorm(x, gamma, beta)
        # fused q/k/v projection: one (N,H) x (H,3H) matmul
        qkv = jnp.dot(xn.astype(mm_dtype), wqkv_ref[...],
                      preferred_element_type=jnp.float32) + bqkv_ref[...]
        q = qkv[:, :H]
        k = qkv[:, H:2 * H]
        v = qkv[:, 2 * H:]
        # per-head attention: (q*k) @ block-diag-ones broadcasts each head's
        # inner product to every channel of that head; applying SiLU after the
        # matmul equals SiLU(per-head sum) broadcast (equal values per head).
        attn_b = _silu(jnp.dot((q * k).astype(mm_dtype), hmask_ref[...],
                               preferred_element_type=jnp.float32))
        v_flat = v * attn_b                      # message()'s flattened v_j
        # fused s_proj (2H, SiLU) + o_proj (3H, linear): one (H,5H) matmul,
        # SiLU selected per-column via a channel mask.
        so = jnp.dot(v_flat.astype(mm_dtype), wso_ref[...],
                     preferred_element_type=jnp.float32) + bso_ref[...]
        so = jnp.where(amask_ref[...] > 0.5, _silu(so), so)
        s1_sc[...] = so[:, :H]
        s2_sc[...] = so[:, H:2 * H]
        o1_sc[...] = so[:, 2 * H:3 * H]
        o2_sc[...] = so[:, 3 * H:4 * H]
        o3_sc[...] = so[:, 4 * H:]
        acc_sc[...] = jnp.zeros_like(acc_sc)

    # ---- edge math: streamed over N_i tiles ---------------------------------
    vec = ef_ref[...]                            # (ti, N_j, H)
    ti, nj, _ = vec.shape
    vln = _layernorm(vec, gamma, beta)

    # fused vec_proj: one (ti*N_j, H) x (H, 3H) matmul.
    vproj = jnp.dot(vln.reshape(ti * nj, H).astype(mm_dtype), wvec_ref[...],
                    preferred_element_type=jnp.float32)      # (ti*N_j, 3H)
    vec1 = vproj[:, :H].reshape(ti, nj, H)
    vec2 = vproj[:, H:2 * H].reshape(ti, nj, H)
    vec3 = vproj[:, 2 * H:].reshape(ti, nj, H)

    # vec_dot = sum over the atom (N_i) dimension, accumulated across tiles.
    acc_sc[...] += jnp.sum(vec1 * vec2, axis=0)

    # dvec = vec3 * o1[:,None] + (vec_ln * s1[:,None] + s2[:,None])
    dvec_ref[...] = (vec3 * o1_sc[...][None]
                     + vln * s1_sc[...][None] + s2_sc[...][None])

    # dx block stays resident in VMEM across the i axis; only the value after
    # the last i step is written back to HBM.  Writing it unconditionally is
    # negligible (N x H elementwise) and robust to output-revisit semantics.
    dx_ref[...] = acc_sc[...] * o2_sc[...] + o3_sc[...]


# ------------------------------- wrapper ------------------------------------
def _choose_i_tile(N, H, itemsize=4, budget_bytes=24 * 1024 * 1024):
    """Largest N_i tile s.t. double-buffered ef/dvec tiles + temporaries fit."""
    # per i-row: N*H elems in (ef) + out (dvec), double-buffered, plus ~4x
    # in-kernel temporaries (vln, vproj, products).
    per_row = N * H * itemsize * 8
    ti = max(1, budget_bytes // per_row)
    if ti >= N:
        return N
    ti = max(8, (ti // 8) * 8)
    while N % ti:
        ti -= 8
        if ti < 8:
            return N
    return ti


def gnn_lf_attention_message(s, ef_mask, params, num_heads, *,
                             matmul_dtype=jnp.float32,
                             i_tile=None,
                             vmem_limit_bytes=48 * 1024 * 1024):
    B, N, H = s.shape
    assert ef_mask.shape == (B, N, N, H)
    assert H % num_heads == 0
    f32 = jnp.float32
    wd = matmul_dtype

    gamma = params["ln_gamma"].reshape(1, H).astype(f32)
    beta = params["ln_beta"].reshape(1, H).astype(f32)

    def wt(name):          # (out,in) PyTorch weight -> (in,out) for x @ W
        return params[name].T.astype(wd)

    def bias(name):
        return params[name].reshape(1, -1).astype(f32)

    # fused weights / biases (glue, in JAX)
    w_qkv = jnp.concatenate([wt("wq"), wt("wk"), wt("wv")], axis=1)        # (H,3H)
    b_qkv = jnp.concatenate([bias("bq"), bias("bk"), bias("bv")], axis=1)  # (1,3H)
    w_so = jnp.concatenate([wt("ws"), wt("wo")], axis=1)                   # (H,5H)
    b_so = jnp.concatenate([bias("bs"), bias("bo")], axis=1)               # (1,5H)
    w_vec = wt("wvec")                                                     # (H,3H)

    # block-diagonal all-ones matrix for per-head sums (precomputed on host)
    head_dim = H // num_heads
    head_id = jnp.arange(H) // head_dim
    hmask = (head_id[:, None] == head_id[None, :]).astype(wd)              # (H,H)
    # SiLU applies to the first 2H (s_proj) columns of the fused 5H output
    amask = (jnp.arange(5 * H) < 2 * H).astype(f32).reshape(1, 5 * H)

    ti = i_tile if i_tile is not None else _choose_i_tile(
        N, H, budget_bytes=vmem_limit_bytes // 2)
    assert N % ti == 0, f"i_tile {ti} must divide N {N}"
    grid = (B, N // ti)

    def const_spec(shape):
        return pl.BlockSpec(shape, lambda b, i: (0,) * len(shape))

    in_specs = [
        pl.BlockSpec((None, N, H), lambda b, i: (b, 0, 0)),                # s
        pl.BlockSpec((None, ti, N, H), lambda b, i: (b, i, 0, 0)),         # ef
        const_spec((1, H)), const_spec((1, H)),                            # gamma, beta
        const_spec((H, 3 * H)), const_spec((1, 3 * H)),                    # wqkv, bqkv
        const_spec((H, H)),                                                # hmask
        const_spec((H, 5 * H)), const_spec((1, 5 * H)),                    # wso, bso
        const_spec((1, 5 * H)),                                            # amask
        const_spec((H, 3 * H)),                                            # wvec
    ]
    out_specs = (
        pl.BlockSpec((None, N, H), lambda b, i: (b, 0, 0)),                # dx
        pl.BlockSpec((None, ti, N, H), lambda b, i: (b, i, 0, 0)),         # dvec
    )
    scratch_shapes = [pltpu.VMEM((N, H), f32) for _ in range(6)]  # s1,s2,o1,o2,o3,acc

    dx, dvec = pl.pallas_call(
        functools.partial(gnnlf_kernel, H=H, mm_dtype=wd),
        out_shape=(jax.ShapeDtypeStruct((B, N, H), f32),
                   jax.ShapeDtypeStruct((B, N, N, H), f32)),
        grid=grid,
        in_specs=in_specs,
        out_specs=out_specs,
        scratch_shapes=scratch_shapes,
        compiler_params=pltpu.CompilerParams(
            dimension_semantics=("parallel", "arbitrary"),
            vmem_limit_bytes=vmem_limit_bytes),
    )(s.astype(f32), ef_mask.astype(f32), gamma, beta,
      w_qkv, b_qkv, hmask, w_so, b_so, amask, w_vec)

    return dx, dvec, None


# -------------------------- pure-JAX reference -------------------------------
def reference(s, ef, p, num_heads):
    B, N, H = s.shape
    hd = H // num_heads

    def ln(x):
        return _layernorm(x, p["ln_gamma"], p["ln_beta"])

    x = ln(s)
    vec = ln(ef)
    q = (x @ p["wq"].T + p["bq"]).reshape(B, N, num_heads, hd)
    k = (x @ p["wk"].T + p["bk"]).reshape(B, N, num_heads, hd)
    v = (x @ p["wv"].T + p["bv"]).reshape(B, N, num_heads, hd)
    vproj = vec @ p["wvec"].T
    vec1, vec2, vec3 = vproj[..., :H], vproj[..., H:2 * H], vproj[..., 2 * H:]
    vec_dot = (vec1 * vec2).sum(axis=1)

    attn = _silu((q * k).sum(-1))
    vj = (v * attn[..., None]).reshape(B, N, H)
    sp = _silu(vj @ p["ws"].T + p["bs"])
    s1, s2 = sp[..., :H], sp[..., H:]
    vec_out = vec * s1[:, None] + s2[:, None]
    op = vj @ p["wo"].T + p["bo"]
    o1, o2, o3 = op[..., :H], op[..., H:2 * H], op[..., 2 * H:]
    dx = vec_dot * o2 + o3
    dvec = vec3 * o1[:, None] + vec_out
    return dx, dvec


# ------------------------------- main ---------------------------------------
def _xavier(key, out_f, in_f):
    a = (6.0 / (in_f + out_f)) ** 0.5
    return jax.random.uniform(key, (out_f, in_f), jnp.float32, -a, a)


if __name__ == "__main__":
    B, N, H, num_heads = 2, 16, 32, 4

    key = jax.random.PRNGKey(0)
    keys = jax.random.split(key, 16)
    params = {
        # LayerNorm (reset_parameters -> weight=1, bias=0; shared for x & vec,
        # matching the PyTorch module which applies self.layernorm to both)
        "ln_gamma": jnp.ones((H,), jnp.float32),
        "ln_beta": jnp.zeros((H,), jnp.float32),
        # projections (PyTorch Linear layout: (out_features, in_features))
        "wq": _xavier(keys[0], H, H), "bq": 0.01 * jax.random.normal(keys[1], (H,)),
        "wk": _xavier(keys[2], H, H), "bk": 0.01 * jax.random.normal(keys[3], (H,)),
        "wv": _xavier(keys[4], H, H), "bv": 0.01 * jax.random.normal(keys[5], (H,)),
        "ws": _xavier(keys[6], 2 * H, H), "bs": 0.01 * jax.random.normal(keys[7], (2 * H,)),
        "wo": _xavier(keys[8], 3 * H, H), "bo": 0.01 * jax.random.normal(keys[9], (3 * H,)),
        "wvec": _xavier(keys[10], 3 * H, H),   # vec_proj has no bias
    }

    s = jax.random.normal(keys[11], (B, N, H), jnp.float32)
    ef_mask = jax.random.normal(keys[12], (B, N, N, H), jnp.float32)

    dx_ref, dvec_ref = reference(s, ef_mask, params, num_heads)

    # 1) default (auto) N_i tile — whole edge block per batch at these shapes
    dx, dvec, _ = gnn_lf_attention_message(s, ef_mask, params, num_heads)
    jax.block_until_ready((dx, dvec))
    assert dx.shape == (B, N, H) and dvec.shape == (B, N, N, H)
    assert jnp.allclose(dx, dx_ref, atol=5e-4, rtol=5e-4), "dx mismatch"
    assert jnp.allclose(dvec, dvec_ref, atol=5e-4, rtol=5e-4), "dvec mismatch"

    # 2) forced smaller N_i tile — exercises the multi-step accumulator path
    dx2, dvec2, _ = gnn_lf_attention_message(s, ef_mask, params, num_heads, i_tile=8)
    jax.block_until_ready((dx2, dvec2))
    assert jnp.allclose(dx2, dx_ref, atol=5e-4, rtol=5e-4), "dx mismatch (tiled)"
    assert jnp.allclose(dvec2, dvec_ref, atol=5e-4, rtol=5e-4), "dvec mismatch (tiled)"

    # TODO(synk): on v6e/v7x pass matmul_dtype=jnp.bfloat16 (and optionally emit
    # dvec in bf16) to halve HBM-bound edge traffic; kept f32 here for the
    # tight correctness check.
    print("KERNEL_OK")
</pallas_src>

<mosaic_0001>
module attributes {stable_mosaic.version = 11 : i64} {
  func.func @gnnlf_kernel(%arg0: i32, %arg1: i32, %arg2: memref<1x16x32xf32, #tpu.memory_space<vmem>>, %arg3: memref<1x16x16x32xf32, #tpu.memory_space<vmem>>, %arg4: memref<1x32xf32, #tpu.memory_space<vmem>>, %arg5: memref<1x32xf32, #tpu.memory_space<vmem>>, %arg6: memref<32x96xf32, #tpu.memory_space<vmem>>, %arg7: memref<1x96xf32, #tpu.memory_space<vmem>>, %arg8: memref<32x32xf32, #tpu.memory_space<vmem>>, %arg9: memref<32x160xf32, #tpu.memory_space<vmem>>, %arg10: memref<1x160xf32, #tpu.memory_space<vmem>>, %arg11: memref<1x160xf32, #tpu.memory_space<vmem>>, %arg12: memref<32x96xf32, #tpu.memory_space<vmem>>, %arg13: memref<1x16x32xf32, #tpu.memory_space<vmem>>, %arg14: memref<1x16x16x32xf32, #tpu.memory_space<vmem>>, %arg15: memref<16x32xf32, #tpu.memory_space<vmem>>, %arg16: memref<16x32xf32, #tpu.memory_space<vmem>>, %arg17: memref<16x32xf32, #tpu.memory_space<vmem>>, %arg18: memref<16x32xf32, #tpu.memory_space<vmem>>, %arg19: memref<16x32xf32, #tpu.memory_space<vmem>>, %arg20: memref<16x32xf32, #tpu.memory_space<vmem>>) attributes {dimension_semantics = [#tpu.dimension_semantics<parallel>, #tpu.dimension_semantics<arbitrary>], iteration_bounds = array<i64: 2, 1>, scalar_prefetch = 0 : i64, scratch_operands = 6 : i64, tpu.core_type = #tpu.core_type<tc>, window_params = [{transform_indices = @transform_0, window_bounds = array<i64: 1, 16, 32>}, {transform_indices = @transform_1, window_bounds = array<i64: 1, 16, 16, 32>}, {pipeline_mode = #tpu.pipeline_mode<synchronous>, transform_indices = @transform_2, window_bounds = array<i64: 1, 32>}, {pipeline_mode = #tpu.pipeline_mode<synchronous>, transform_indices = @transform_3, window_bounds = array<i64: 1, 32>}, {pipeline_mode = #tpu.pipeline_mode<synchronous>, transform_indices = @transform_4, window_bounds = array<i64: 32, 96>}, {pipeline_mode = #tpu.pipeline_mode<synchronous>, transform_indices = @transform_5, window_bounds = array<i64: 1, 96>}, {pipeline_mode = #tpu.pipeline_mode<synchronous>, transform_indices = @transform_6, window_bounds = array<i64: 32, 32>}, {pipeline_mode = #tpu.pipeline_mode<synchronous>, transform_indices = @transform_7, window_bounds = array<i64: 32, 160>}, {pipeline_mode = #tpu.pipeline_mode<synchronous>, transform_indices = @transform_8, window_bounds = array<i64: 1, 160>}, {pipeline_mode = #tpu.pipeline_mode<synchronous>, transform_indices = @transform_9, window_bounds = array<i64: 1, 160>}, {pipeline_mode = #tpu.pipeline_mode<synchronous>, transform_indices = @transform_10, window_bounds = array<i64: 32, 96>}, {transform_indices = @transform_11, window_bounds = array<i64: 1, 16, 32>}, {transform_indices = @transform_12, window_bounds = array<i64: 1, 16, 16, 32>}]} {
    %c0 = arith.constant 0 : index
    %c0_0 = arith.constant 0 : index
    %0 = vector.load %arg4[%c0, %c0_0] : memref<1x32xf32, #tpu.memory_space<vmem>>, vector<1x32xf32>
    %c0_1 = arith.constant 0 : index
    %c0_2 = arith.constant 0 : index
    %1 = vector.load %arg5[%c0_1, %c0_2] : memref<1x32xf32, #tpu.memory_space<vmem>>, vector<1x32xf32>
    %c0_i32 = arith.constant 0 : i32
    %2 = arith.cmpi eq, %arg1, %c0_i32 : i32
    %3 = arith.extui %2 : i1 to i32
    %c0_i32_3 = arith.constant 0 : i32
    %4 = arith.cmpi ne, %3, %c0_i32_3 : i32
    scf.if %4 {
      %c0_39 = arith.constant 0 : index
      %c0_40 = arith.constant 0 : index
      %c0_41 = arith.constant 0 : index
      %69 = vector.load %arg2[%c0_39, %c0_40, %c0_41] : memref<1x16x32xf32, #tpu.memory_space<vmem>>, vector<1x16x32xf32>
      %70 = vector.shape_cast %69 : vector<1x16x32xf32> to vector<16x32xf32>
      %cst_42 = arith.constant dense<0.000000e+00> : vector<16xf32>
      %71 = vector.multi_reduction <add>, %70, %cst_42 [1] : vector<16x32xf32> to vector<16xf32>
      %72 = vector.shape_cast %71 : vector<16xf32> to vector<16x1xf32>
      %cst_43 = arith.constant 3.200000e+01 : f32
      %73 = vector.broadcast %cst_43 : f32 to vector<16x1xf32>
      %74 = arith.divf %72, %73 : vector<16x1xf32>
      %75 = vector.broadcast %74 : vector<16x1xf32> to vector<16x32xf32>
      %76 = arith.subf %70, %75 : vector<16x32xf32>
      %77 = arith.mulf %76, %76 : vector<16x32xf32>
      %cst_44 = arith.constant dense<0.000000e+00> : vector<16xf32>
      %78 = vector.multi_reduction <add>, %77, %cst_44 [1] : vector<16x32xf32> to vector<16xf32>
      %79 = vector.shape_cast %78 : vector<16xf32> to vector<16x1xf32>
      %cst_45 = arith.constant 3.200000e+01 : f32
      %80 = vector.broadcast %cst_45 : f32 to vector<16x1xf32>
      %81 = arith.divf %79, %80 : vector<16x1xf32>
      %82 = vector.broadcast %74 : vector<16x1xf32> to vector<16x32xf32>
      %83 = arith.subf %70, %82 : vector<16x32xf32>
      %cst_46 = arith.constant 9.99999974E-6 : f32
      %84 = vector.broadcast %cst_46 : f32 to vector<16x1xf32>
      %85 = arith.addf %81, %84 : vector<16x1xf32>
      %86 = math.rsqrt %85 : vector<16x1xf32>
      %87 = vector.broadcast %86 : vector<16x1xf32> to vector<16x32xf32>
      %88 = arith.mulf %83, %87 : vector<16x32xf32>
      %89 = vector.broadcast %0 : vector<1x32xf32> to vector<16x32xf32>
      %90 = arith.mulf %88, %89 : vector<16x32xf32>
      %91 = vector.broadcast %1 : vector<1x32xf32> to vector<16x32xf32>
      %92 = arith.addf %90, %91 : vector<16x32xf32>
      %c0_47 = arith.constant 0 : index
      %c0_48 = arith.constant 0 : index
      %93 = vector.load %arg6[%c0_47, %c0_48] : memref<32x96xf32, #tpu.memory_space<vmem>>, vector<32x96xf32>
      %cst_49 = arith.constant dense<0.000000e+00> : vector<16x96xf32>
      %94 = tpu.matmul %92, %93, %cst_49 {dimension_numbers = #tpu.dot_dimension_numbers<[1], [0], [0], [1], [0, 0, 1, 1], [], []>} : vector<16x32xf32>, vector<32x96xf32>, vector<16x96xf32> -> vector<16x96xf32>
      %c0_50 = arith.constant 0 : index
      %c0_51 = arith.constant 0 : index
      %95 = vector.load %arg7[%c0_50, %c0_51] : memref<1x96xf32, #tpu.memory_space<vmem>>, vector<1x96xf32>
      %96 = vector.broadcast %95 : vector<1x96xf32> to vector<16x96xf32>
      %97 = arith.addf %94, %96 : vector<16x96xf32>
      %98 = vector.extract_strided_slice %97 {offsets = [0, 0], sizes = [16, 32], strides = [1, 1]} : vector<16x96xf32> to vector<16x32xf32>
      %99 = vector.extract_strided_slice %97 {offsets = [0, 32], sizes = [16, 32], strides = [1, 1]} : vector<16x96xf32> to vector<16x32xf32>
      %100 = vector.extract_strided_slice %97 {offsets = [0, 64], sizes = [16, 32], strides = [1, 1]} : vector<16x96xf32> to vector<16x32xf32>
      %101 = arith.mulf %98, %99 : vector<16x32xf32>
      %c0_52 = arith.constant 0 : index
      %c0_53 = arith.constant 0 : index
      %102 = vector.load %arg8[%c0_52, %c0_53] : memref<32x32xf32, #tpu.memory_space<vmem>>, vector<32x32xf32>
      %cst_54 = arith.constant dense<0.000000e+00> : vector<16x32xf32>
      %103 = tpu.matmul %101, %102, %cst_54 {dimension_numbers = #tpu.dot_dimension_numbers<[1], [0], [0], [1], [0, 0, 1, 1], [], []>} : vector<16x32xf32>, vector<32x32xf32>, vector<16x32xf32> -> vector<16x32xf32>
      %104 = arith.negf %103 : vector<16x32xf32>
      %105 = math.exp %104 : vector<16x32xf32>
      %cst_55 = arith.constant 1.000000e+00 : f32
      %106 = vector.broadcast %cst_55 : f32 to vector<16x32xf32>
      %107 = arith.addf %106, %105 : vector<16x32xf32>
      %108 = arith.divf %106, %107 : vector<16x32xf32>
      %109 = arith.mulf %103, %108 : vector<16x32xf32>
      %110 = arith.mulf %100, %109 : vector<16x32xf32>
      %c0_56 = arith.constant 0 : index
      %c0_57 = arith.constant 0 : index
      %111 = vector.load %arg9[%c0_56, %c0_57] : memref<32x160xf32, #tpu.memory_space<vmem>>, vector<32x160xf32>
      %cst_58 = arith.constant dense<0.000000e+00> : vector<16x160xf32>
      %112 = tpu.matmul %110, %111, %cst_58 {dimension_numbers = #tpu.dot_dimension_numbers<[1], [0], [0], [1], [0, 0, 1, 1], [], []>} : vector<16x32xf32>, vector<32x160xf32>, vector<16x160xf32> -> vector<16x160xf32>
      %c0_59 = arith.constant 0 : index
      %c0_60 = arith.constant 0 : index
      %113 = vector.load %arg10[%c0_59, %c0_60] : memref<1x160xf32, #tpu.memory_space<vmem>>, vector<1x160xf32>
      %114 = vector.broadcast %113 : vector<1x160xf32> to vector<16x160xf32>
      %115 = arith.addf %112, %114 : vector<16x160xf32>
      %c0_61 = arith.constant 0 : index
      %c0_62 = arith.constant 0 : index
      %116 = vector.load %arg11[%c0_61, %c0_62] : memref<1x160xf32, #tpu.memory_space<vmem>>, vector<1x160xf32>
      %cst_63 = arith.constant 5.000000e-01 : f32
      %117 = vector.broadcast %cst_63 : f32 to vector<1x160xf32>
      %118 = arith.cmpf ogt, %116, %117 : vector<1x160xf32>
      %119 = arith.negf %115 : vector<16x160xf32>
      %120 = math.exp %119 : vector<16x160xf32>
      %cst_64 = arith.constant 1.000000e+00 : f32
      %121 = vector.broadcast %cst_64 : f32 to vector<16x160xf32>
      %122 = arith.addf %121, %120 : vector<16x160xf32>
      %123 = arith.divf %121, %122 : vector<16x160xf32>
      %124 = arith.mulf %115, %123 : vector<16x160xf32>
      %125 = vector.shape_cast %118 : vector<1x160xi1> to vector<1x160xi1>
      %126 = vector.broadcast %125 : vector<1x160xi1> to vector<16x160xi1>
      %127 = arith.select %126, %124, %115 : vector<16x160xi1>, vector<16x160xf32>
      %128 = vector.extract_strided_slice %127 {offsets = [0, 0], sizes = [16, 32], strides = [1, 1]} : vector<16x160xf32> to vector<16x32xf32>
      %c0_65 = arith.constant 0 : index
      %c0_66 = arith.constant 0 : index
      %129 = vector.load %arg15[%c0_65, %c0_66] : memref<16x32xf32, #tpu.memory_space<vmem>>, vector<16x32xf32>
      tpu.vector_store %arg15[%c0_65, %c0_66], %128 {strides = array<i32>} : memref<16x32xf32, #tpu.memory_space<vmem>>, vector<16x32xf32>,
      %130 = vector.extract_strided_slice %127 {offsets = [0, 32], sizes = [16, 32], strides = [1, 1]} : vector<16x160xf32> to vector<16x32xf32>
      %c0_67 = arith.constant 0 : index
      %c0_68 = arith.constant 0 : index
      %131 = vector.load %arg16[%c0_67, %c0_68] : memref<16x32xf32, #tpu.memory_space<vmem>>, vector<16x32xf32>
      tpu.vector_store %arg16[%c0_67, %c0_68], %130 {strides = array<i32>} : memref<16x32xf32, #tpu.memory_space<vmem>>, vector<16x32xf32>,
      %132 = vector.extract_strided_slice %127 {offsets = [0, 64], sizes = [16, 32], strides = [1, 1]} : vector<16x160xf32> to vector<16x32xf32>
      %c0_69 = arith.constant 0 : index
      %c0_70 = arith.constant 0 : index
      %133 = vector.load %arg17[%c0_69, %c0_70] : memref<16x32xf32, #tpu.memory_space<vmem>>, vector<16x32xf32>
      tpu.vector_store %arg17[%c0_69, %c0_70], %132 {strides = array<i32>} : memref<16x32xf32, #tpu.memory_space<vmem>>, vector<16x32xf32>,
      %134 = vector.extract_strided_slice %127 {offsets = [0, 96], sizes = [16, 32], strides = [1, 1]} : vector<16x160xf32> to vector<16x32xf32>
      %c0_71 = arith.constant 0 : index
      %c0_72 = arith.constant 0 : index
      %135 = vector.load %arg18[%c0_71, %c0_72] : memref<16x32xf32, #tpu.memory_space<vmem>>, vector<16x32xf32>
      tpu.vector_store %arg18[%c0_71, %c0_72], %134 {strides = array<i32>} : memref<16x32xf32, #tpu.memory_space<vmem>>, vector<16x32xf32>,
      %136 = vector.extract_strided_slice %127 {offsets = [0, 128], sizes = [16, 32], strides = [1, 1]} : vector<16x160xf32> to vector<16x32xf32>
      %c0_73 = arith.constant 0 : index
      %c0_74 = arith.constant 0 : index
      %137 = vector.load %arg19[%c0_73, %c0_74] : memref<16x32xf32, #tpu.memory_space<vmem>>, vector<16x32xf32>
      tpu.vector_store %arg19[%c0_73, %c0_74], %136 {strides = array<i32>} : memref<16x32xf32, #tpu.memory_space<vmem>>, vector<16x32xf32>,
      %cst_75 = arith.constant 0.000000e+00 : f32
      %138 = vector.broadcast %cst_75 : f32 to vector<16x32xf32>
      %c0_76 = arith.constant 0 : index
      %c0_77 = arith.constant 0 : index
      %139 = vector.load %arg20[%c0_76, %c0_77] : memref<16x32xf32, #tpu.memory_space<vmem>>, vector<16x32xf32>
      tpu.vector_store %arg20[%c0_76, %c0_77], %138 {strides = array<i32>} : memref<16x32xf32, #tpu.memory_space<vmem>>, vector<16x32xf32>,
    } else {
    }
    %c0_4 = arith.constant 0 : index
    %c0_5 = arith.constant 0 : index
    %c0_6 = arith.constant 0 : index
    %c0_7 = arith.constant 0 : index
    %5 = vector.load %arg3[%c0_4, %c0_5, %c0_6, %c0_7] : memref<1x16x16x32xf32, #tpu.memory_space<vmem>>, vector<1x16x16x32xf32>
    %6 = vector.shape_cast %5 : vector<1x16x16x32xf32> to vector<16x16x32xf32>
    %cst = arith.constant dense<0.000000e+00> : vector<16x16xf32>
    %7 = vector.multi_reduction <add>, %6, %cst [2] : vector<16x16x32xf32> to vector<16x16xf32>
    %8 = vector.shape_cast %7 : vector<16x16xf32> to vector<16x16x1xf32>
    %cst_8 = arith.constant 3.200000e+01 : f32
    %9 = vector.broadcast %cst_8 : f32 to vector<16x16x1xf32>
    %10 = arith.divf %8, %9 : vector<16x16x1xf32>
    %11 = vector.broadcast %10 : vector<16x16x1xf32> to vector<16x16x32xf32>
    %12 = arith.subf %6, %11 : vector<16x16x32xf32>
    %13 = arith.mulf %12, %12 : vector<16x16x32xf32>
    %cst_9 = arith.constant dense<0.000000e+00> : vector<16x16xf32>
    %14 = vector.multi_reduction <add>, %13, %cst_9 [2] : vector<16x16x32xf32> to vector<16x16xf32>
    %15 = vector.shape_cast %14 : vector<16x16xf32> to vector<16x16x1xf32>
    %cst_10 = arith.constant 3.200000e+01 : f32
    %16 = vector.broadcast %cst_10 : f32 to vector<16x16x1xf32>
    %17 = arith.divf %15, %16 : vector<16x16x1xf32>
    %18 = vector.broadcast %10 : vector<16x16x1xf32> to vector<16x16x32xf32>
    %19 = arith.subf %6, %18 : vector<16x16x32xf32>
    %cst_11 = arith.constant 9.99999974E-6 : f32
    %20 = vector.broadcast %cst_11 : f32 to vector<16x16x1xf32>
    %21 = arith.addf %17, %20 : vector<16x16x1xf32>
    %22 = math.rsqrt %21 : vector<16x16x1xf32>
    %23 = vector.broadcast %22 : vector<16x16x1xf32> to vector<16x16x32xf32>
    %24 = arith.mulf %19, %23 : vector<16x16x32xf32>
    %25 = vector.shape_cast %0 : vector<1x32xf32> to vector<1x1x32xf32>
    %26 = vector.broadcast %25 : vector<1x1x32xf32> to vector<16x16x32xf32>
    %27 = arith.mulf %24, %26 : vector<16x16x32xf32>
    %28 = vector.shape_cast %1 : vector<1x32xf32> to vector<1x1x32xf32>
    %29 = vector.broadcast %28 : vector<1x1x32xf32> to vector<16x16x32xf32>
    %30 = arith.addf %27, %29 : vector<16x16x32xf32>
    %31 = vector.shape_cast %30 : vector<16x16x32xf32> to vector<256x32xf32>
    %c0_12 = arith.constant 0 : index
    %c0_13 = arith.constant 0 : index
    %32 = vector.load %arg12[%c0_12, %c0_13] : memref<32x96xf32, #tpu.memory_space<vmem>>, vector<32x96xf32>
    %cst_14 = arith.constant dense<0.000000e+00> : vector<256x96xf32>
    %33 = tpu.matmul %31, %32, %cst_14 {dimension_numbers = #tpu.dot_dimension_numbers<[1], [0], [0], [1], [0, 0, 1, 1], [], []>} : vector<256x32xf32>, vector<32x96xf32>, vector<256x96xf32> -> vector<256x96xf32>
    %34 = vector.extract_strided_slice %33 {offsets = [0, 0], sizes = [256, 32], strides = [1, 1]} : vector<256x96xf32> to vector<256x32xf32>
    %35 = vector.shape_cast %34 : vector<256x32xf32> to vector<16x16x32xf32>
    %36 = vector.extract_strided_slice %33 {offsets = [0, 32], sizes = [256, 32], strides = [1, 1]} : vector<256x96xf32> to vector<256x32xf32>
    %37 = vector.shape_cast %36 : vector<256x32xf32> to vector<16x16x32xf32>
    %38 = vector.extract_strided_slice %33 {offsets = [0, 64], sizes = [256, 32], strides = [1, 1]} : vector<256x96xf32> to vector<256x32xf32>
    %39 = vector.shape_cast %38 : vector<256x32xf32> to vector<16x16x32xf32>
    %c0_15 = arith.constant 0 : index
    %c0_16 = arith.constant 0 : index
    %40 = vector.load %arg20[%c0_15, %c0_16] : memref<16x32xf32, #tpu.memory_space<vmem>>, vector<16x32xf32>
    %41 = arith.mulf %35, %37 : vector<16x16x32xf32>
    %cst_17 = arith.constant dense<0.000000e+00> : vector<16x32xf32>
    %42 = vector.multi_reduction <add>, %41, %cst_17 [0] : vector<16x16x32xf32> to vector<16x32xf32>
    %43 = arith.addf %40, %42 : vector<16x32xf32>
    %c0_18 = arith.constant 0 : index
    %c0_19 = arith.constant 0 : index
    %44 = vector.load %arg20[%c0_18, %c0_19] : memref<16x32xf32, #tpu.memory_space<vmem>>, vector<16x32xf32>
    tpu.vector_store %arg20[%c0_18, %c0_19], %43 {strides = array<i32>} : memref<16x32xf32, #tpu.memory_space<vmem>>, vector<16x32xf32>,
    %c0_20 = arith.constant 0 : index
    %c0_21 = arith.constant 0 : index
    %45 = vector.load %arg17[%c0_20, %c0_21] : memref<16x32xf32, #tpu.memory_space<vmem>>, vector<16x32xf32>
    %46 = vector.shape_cast %45 : vector<16x32xf32> to vector<1x16x32xf32>
    %47 = vector.broadcast %46 : vector<1x16x32xf32> to vector<16x16x32xf32>
    %48 = arith.mulf %39, %47 : vector<16x16x32xf32>
    %c0_22 = arith.constant 0 : index
    %c0_23 = arith.constant 0 : index
    %49 = vector.load %arg15[%c0_22, %c0_23] : memref<16x32xf32, #tpu.memory_space<vmem>>, vector<16x32xf32>
    %50 = vector.shape_cast %49 : vector<16x32xf32> to vector<1x16x32xf32>
    %51 = vector.broadcast %50 : vector<1x16x32xf32> to vector<16x16x32xf32>
    %52 = arith.mulf %30, %51 : vector<16x16x32xf32>
    %53 = arith.addf %48, %52 : vector<16x16x32xf32>
    %c0_24 = arith.constant 0 : index
    %c0_25 = arith.constant 0 : index
    %54 = vector.load %arg16[%c0_24, %c0_25] : memref<16x32xf32, #tpu.memory_space<vmem>>, vector<16x32xf32>
    %55 = vector.shape_cast %54 : vector<16x32xf32> to vector<1x16x32xf32>
    %56 = vector.broadcast %55 : vector<1x16x32xf32> to vector<16x16x32xf32>
    %57 = arith.addf %53, %56 : vector<16x16x32xf32>
    %c0_26 = arith.constant 0 : index
    %c0_27 = arith.constant 0 : index
    %c0_28 = arith.constant 0 : index
    %c0_29 = arith.constant 0 : index
    %58 = vector.load %arg14[%c0_26, %c0_27, %c0_28, %c0_29] : memref<1x16x16x32xf32, #tpu.memory_space<vmem>>, vector<1x16x16x32xf32>
    %59 = vector.shape_cast %58 : vector<1x16x16x32xf32> to vector<16x16x32xf32>
    %60 = vector.shape_cast %57 : vector<16x16x32xf32> to vector<1x16x16x32xf32>
    tpu.vector_store %arg14[%c0_26, %c0_27, %c0_28, %c0_29], %60 {strides = array<i32>} : memref<1x16x16x32xf32, #tpu.memory_space<vmem>>, vector<1x16x16x32xf32>,
    %c0_30 = arith.constant 0 : index
    %c0_31 = arith.constant 0 : index
    %61 = vector.load %arg20[%c0_30, %c0_31] : memref<16x32xf32, #tpu.memory_space<vmem>>, vector<16x32xf32>
    %c0_32 = arith.constant 0 : index
    %c0_33 = arith.constant 0 : index
    %62 = vector.load %arg18[%c0_32, %c0_33] : memref<16x32xf32, #tpu.memory_space<vmem>>, vector<16x32xf32>
    %63 = arith.mulf %61, %62 : vector<16x32xf32>
    %c0_34 = arith.constant 0 : index
    %c0_35 = arith.constant 0 : index
    %64 = vector.load %arg19[%c0_34, %c0_35] : memref<16x32xf32, #tpu.memory_space<vmem>>, vector<16x32xf32>
    %65 = arith.addf %63, %64 : vector<16x32xf32>
    %c0_36 = arith.constant 0 : index
    %c0_37 = arith.constant 0 : index
    %c0_38 = arith.constant 0 : index
    %66 = vector.load %arg13[%c0_36, %c0_37, %c0_38] : memref<1x16x32xf32, #tpu.memory_space<vmem>>, vector<1x16x32xf32>
    %67 = vector.shape_cast %66 : vector<1x16x32xf32> to vector<16x32xf32>
    %68 = vector.shape_cast %65 : vector<16x32xf32> to vector<1x16x32xf32>
    tpu.vector_store %arg13[%c0_36, %c0_37, %c0_38], %68 {strides = array<i32>} : memref<1x16x32xf32, #tpu.memory_space<vmem>>, vector<1x16x32xf32>,
    return
  }
  func.func @transform_0(%arg0: i32, %arg1: i32) -> (i32, i32, i32) {
    %c0_i32 = arith.constant 0 : i32
    %c0_i32_0 = arith.constant 0 : i32
    %c0_i32_1 = arith.constant 0 : i32
    return %arg0, %c0_i32, %c0_i32_0 : i32, i32, i32
  }
  func.func @transform_1(%arg0: i32, %arg1: i32) -> (i32, i32, i32, i32) {
    %c0_i32 = arith.constant 0 : i32
    %c0_i32_0 = arith.constant 0 : i32
    %c0_i32_1 = arith.constant 0 : i32
    return %arg0, %arg1, %c0_i32, %c0_i32_0 : i32, i32, i32, i32
  }
  func.func @transform_2(%arg0: i32, %arg1: i32) -> (i32, i32) {
    %c0_i32 = arith.constant 0 : i32
    %c0_i32_0 = arith.constant 0 : i32
    %c0_i32_1 = arith.constant 0 : i32
    return %c0_i32, %c0_i32_0 : i32, i32
  }
  func.func @transform_3(%arg0: i32, %arg1: i32) -> (i32, i32) {
    %c0_i32 = arith.constant 0 : i32
    %c0_i32_0 = arith.constant 0 : i32
    %c0_i32_1 = arith.constant 0 : i32
    return %c0_i32, %c0_i32_0 : i32, i32
  }
  func.func @transform_4(%arg0: i32, %arg1: i32) -> (i32, i32) {
    %c0_i32 = arith.constant 0 : i32
    %c0_i32_0 = arith.constant 0 : i32
    %c0_i32_1 = arith.constant 0 : i32
    return %c0_i32, %c0_i32_0 : i32, i32
  }
  func.func @transform_5(%arg0: i32, %arg1: i32) -> (i32, i32) {
    %c0_i32 = arith.constant 0 : i32
    %c0_i32_0 = arith.constant 0 : i32
    %c0_i32_1 = arith.constant 0 : i32
    return %c0_i32, %c0_i32_0 : i32, i32
  }
  func.func @transform_6(%arg0: i32, %arg1: i32) -> (i32, i32) {
    %c0_i32 = arith.constant 0 : i32
    %c0_i32_0 = arith.constant 0 : i32
    %c0_i32_1 = arith.constant 0 : i32
    return %c0_i32, %c0_i32_0 : i32, i32
  }
  func.func @transform_7(%arg0: i32, %arg1: i32) -> (i32, i32) {
    %c0_i32 = arith.constant 0 : i32
    %c0_i32_0 = arith.constant 0 : i32
    %c0_i32_1 = arith.constant 0 : i32
    return %c0_i32, %c0_i32_0 : i32, i32
  }
  func.func @transform_8(%arg0: i32, %arg1: i32) -> (i32, i32) {
    %c0_i32 = arith.constant 0 : i32
    %c0_i32_0 = arith.constant 0 : i32
    %c0_i32_1 = arith.constant 0 : i32
    return %c0_i32, %c0_i32_0 : i32, i32
  }
  func.func @transform_9(%arg0: i32, %arg1: i32) -> (i32, i32) {
    %c0_i32 = arith.constant 0 : i32
    %c0_i32_0 = arith.constant 0 : i32
    %c0_i32_1 = arith.constant 0 : i32
    return %c0_i32, %c0_i32_0 : i32, i32
  }
  func.func @transform_10(%arg0: i32, %arg1: i32) -> (i32, i32) {
    %c0_i32 = arith.constant 0 : i32
    %c0_i32_0 = arith.constant 0 : i32
    %c0_i32_1 = arith.constant 0 : i32
    return %c0_i32, %c0_i32_0 : i32, i32
  }
  func.func @transform_11(%arg0: i32, %arg1: i32) -> (i32, i32, i32) {
    %c0_i32 = arith.constant 0 : i32
    %c0_i32_0 = arith.constant 0 : i32
    %c0_i32_1 = arith.constant 0 : i32
    return %arg0, %c0_i32, %c0_i32_0 : i32, i32, i32
  }
  func.func @transform_12(%arg0: i32, %arg1: i32) -> (i32, i32, i32, i32) {
    %c0_i32 = arith.constant 0 : i32
    %c0_i32_0 = arith.constant 0 : i32
    %c0_i32_1 = arith.constant 0 : i32
    return %arg0, %arg1, %c0_i32, %c0_i32_0 : i32, i32, i32, i32
  }
}

</mosaic_0001>

<llo_original>
// kernel: tpu_custom_call.1
$region0: #{tpu_custom_call.1}
  #allocation0 [shape = 'u32[]', space=smem, size = 0x4, offset = 0x4, fixed_abs, tag = 'smem constant byte address 0x4 - core index']
  #allocation1 [shape = 'u32[144,128]{1,0:T(1,128)}', space=vmem, size = 0x12000, scoped, tag = 'internal scratch']
  #allocation2 [shape = 'f32[16,32]{1,0:T(8,128)}', space=vmem, size = 0x2000, scoped, tag = 'scratch operand']
  #allocation3 [shape = 'f32[16,32]{1,0:T(8,128)}', space=vmem, size = 0x2000, scoped, tag = 'scratch operand']
  #allocation4 [shape = 'f32[16,32]{1,0:T(8,128)}', space=vmem, size = 0x2000, scoped, tag = 'scratch operand']
  #allocation5 [shape = 'f32[16,32]{1,0:T(8,128)}', space=vmem, size = 0x2000, scoped, tag = 'scratch operand']
  #allocation6 [shape = 'f32[16,32]{1,0:T(8,128)}', space=vmem, size = 0x2000, scoped, tag = 'scratch operand']
  #allocation7 [shape = 'f32[16,32]{1,0:T(8,128)}', space=vmem, size = 0x2000, scoped, tag = 'scratch operand']
  %s0 = inlined_call_operand.hbm [shape: f32[2,16,32], index: 0, kind: input, shape index: {}]
  %s1 = inlined_call_operand.hbm [shape: f32[2,16,16,32], index: 1, kind: input, shape index: {}]
  %s2 = inlined_call_operand.vmem [shape: f32[1,32], index: 2, kind: input, shape index: {}]
  %s3 = inlined_call_operand.hbm [shape: f32[1,32], index: 3, kind: input, shape index: {}]
  %s4 = inlined_call_operand.hbm [shape: f32[32,96], index: 4, kind: input, shape index: {}]
  %s5 = inlined_call_operand.vmem [shape: f32[1,96], index: 5, kind: input, shape index: {}]
  %s6 = inlined_call_operand.hbm [shape: f32[32,32], index: 6, kind: input, shape index: {}]
  %s7 = inlined_call_operand.hbm [shape: f32[32,160], index: 7, kind: input, shape index: {}]
  %s8 = inlined_call_operand.vmem [shape: f32[1,160], index: 8, kind: input, shape index: {}]
  %s9 = inlined_call_operand.vmem [shape: f32[1,160], index: 9, kind: input, shape index: {}]
  %s10 = inlined_call_operand.hbm [shape: f32[32,96], index: 10, kind: input, shape index: {}]
  %s11 = inlined_call_operand.hbm [shape: f32[2,16,32], index: 11, kind: output, shape index: {0}]
  %s12 = inlined_call_operand.hbm [shape: f32[2,16,16,32], index: 12, kind: output, shape index: {1}]
  %13 = xla_tuple %s11, %s12
  %s14 = sld [smem:[#allocation0]]
  $region117: #{tpu_custom_call.1} parent=0
    _
  %s16 = ssub.s32 1, %s14
  %s17 = scalar_select 0, %s16, %s14
  $region1: #{tpu_custom_call.1} parent=0
    #allocation8 [shape = 'u8[16384]{0}', space=vmem, size = 0x4000, scoped, tag = 'input window, operand 0']
    #allocation9 [shape = 's32[2]{0}', space=sflag, size = 0x8, scoped, tag = 'scoped memory for tpu_custom_call.1']
    #allocation10 [shape = 's32[2]{0}', space=sflag, size = 0x8, scoped, tag = 'scoped memory for tpu_custom_call.1']
    #allocation11 [shape = 'u8[262144]{0}', space=vmem, size = 0x40000, scoped, tag = 'input window, operand 1']
    #allocation12 [shape = 's32[2]{0}', space=sflag, size = 0x8, scoped, tag = 'scoped memory for tpu_custom_call.1']
    #allocation13 [shape = 'u8[512]{0}', space=vmem, size = 0x400, scoped, tag = 'input window, operand 3, single buffered']
    #allocation14 [shape = 'u8[16384]{0}', space=vmem, size = 0x4000, scoped, tag = 'input window, operand 4, single buffered']
    #allocation15 [shape = 's32[1]{0}', space=sflag, size = 0x4, scoped, tag = 'scoped memory for tpu_custom_call.1']
    #allocation16 [shape = 'u8[16384]{0}', space=vmem, size = 0x4000, scoped, tag = 'input window, operand 6, single buffered']
    #allocation17 [shape = 'u8[32768]{0}', space=vmem, size = 0x8000, scoped, tag = 'input window, operand 7, single buffered']
    #allocation18 [shape = 's32[1]{0}', space=sflag, size = 0x4, scoped, tag = 'scoped memory for tpu_custom_call.1']
    #allocation19 [shape = 'u8[16384]{0}', space=vmem, size = 0x4000, scoped, tag = 'input window, operand 10, single buffered']
    #allocation20 [shape = 'u8[16384]{0}', space=vmem, size = 0x4000, scoped, tag = 'output window, operand 0']
    #allocation21 [shape = 'u8[262144]{0}', space=vmem, size = 0x40000, scoped, tag = 'output window, operand 1']
    #allocation22 [shape = 's32[2]{0}', space=sflag, size = 0x8, scoped, tag = 'scoped memory for tpu_custom_call.1']
    %18 = vsyncpa [#allocation9], 0
    %s19 = scalar_lea.sflag [#allocation9], 1
    %20 = vsyncpa %s19, 0
    %21 = vsyncpa [#allocation12], 0
    %s22 = scalar_lea.sflag [#allocation12], 1
    %23 = vsyncpa %s22, 0
    %24 = vsyncpa [#allocation15], 0
    %25 = vsyncpa [#allocation18], 0
    %26 = vsyncpa [#allocation10], 0
    %s27 = scalar_lea.sflag [#allocation10], 1
    %28 = vsyncpa %s27, 0
    %29 = vsyncpa [#allocation22], 0
    %s30 = scalar_lea.sflag [#allocation22], 1
    %31 = vsyncpa %s30, 0
    loop: start=0, step=1, limit=4
    $region2: #{tpu_custom_call.1} parent=1 // loop_pre_header
      _
    $region3: #{tpu_custom_call.1} parent=1 // loop_header
      %s33 = sphi 0, %s37
      %p34 = scmp.ge.s32.totalorder %s33, 4
      %s40 = sphi 0, %s52
      %s41 = sphi 0, %s48
      %s42 = sphi 0, %s40
      %s43 = sphi 0, %s41
      %s44 = sphi 0, %s42
      %s45 = sphi 0, %s43
      %s55 = sphi 0, %s57
      %s58 = sphi 0, %s55
      %s59 = sphi 0, %s58
      %s75 = sphi 0, %s59
      %s83 = sphi 0, %s85
      %s86 = sphi 0, %s83
      %s87 = sphi 0, %s86
      %s103 = sphi 0, %s87
      %s107 = sphi 0, %s107
      %s109 = sphi 0, %s107
      %s110 = sphi 0, %s109
      %s124 = sphi 0, %s110
      %s128 = sphi 0, %s128
      %s130 = sphi 0, %s128
      %s131 = sphi 0, %s130
      %s145 = sphi 0, %s131
      %s149 = sphi 0, %s149
      %s151 = sphi 0, %s149
      %s152 = sphi 0, %s151
      %s166 = sphi 0, %s152
      %s170 = sphi 0, %s170
      %s172 = sphi 0, %s170
      %s173 = sphi 0, %s172
      %s187 = sphi 0, %s173
      %s191 = sphi 0, %s191
      %s193 = sphi 0, %s191
      %s194 = sphi 0, %s193
      %s208 = sphi 0, %s194
      %s212 = sphi 0, %s212
      %s214 = sphi 0, %s212
      %s215 = sphi 0, %s214
      %s229 = sphi 0, %s215
      %s233 = sphi 0, %s233
      %s235 = sphi 0, %s233
      %s236 = sphi 0, %s235
      %s250 = sphi 0, %s236
      %s254 = sphi 0, %s254
      %s256 = sphi 0, %s254
      %s257 = sphi 0, %s256
      %s271 = sphi 0, %s257
      %s275 = sphi 0, %s275
      %s277 = sphi 0, %s275
      %s278 = sphi 0, %s277
      %s292 = sphi 0, %s278
      %s298 = sphi 0, %s300
      %s301 = sphi 0, %s298
      %s302 = sphi 0, %s301
      %s318 = sphi 0, %s302
      %s326 = sphi 0, %s328
      %s329 = sphi 0, %s326
      %s330 = sphi 0, %s329
      %s346 = sphi 0, %s330
    $region4: #{tpu_custom_call.1} parent=1 // loop_header_branch
      %36 = sbr.rel (%p34) target = $region8
    $region5: #{tpu_custom_call.1} parent=1 // loop_body
      %s38 = ssub.s32 %s33, 1
      %s39 = ssub.s32 %s33, 2
      %s46 = sadd.s32 1, %s41
      %p47 = scmp.ge.s32.totalorder %s46, 1
      %s48 = scalar_select %p47, 0, %s46
      %s49 = sadd.s32 1, %s40
      %s50 = scalar_select %p47, %s49, %s40
      %p51 = scmp.ge.s32.totalorder %s50, 2
      %s52 = scalar_select %p51, 0, %s50
      %s53 = ssub.s32 %s40, %s52
      %p54 = scmp.eq.s32.totalorder %s53, 0
      %s56 = sadd.s32 %s55, 1
      %s57 = scalar_select %p54, %s55, %s56
      %p60 = pneg %p54
      %p61 = scmp.eq.s32.totalorder %s33, 1
      %p62 = por %p60, %p61
      %p63 = scmp.ne.s32.totalorder %s55, %s58
      %p64 = scmp.eq.s32.totalorder %s33, 0
      %p65 = por %p63, %p64
      %p66 = scmp.ne.s32.totalorder %s55, %s58
      %p67 = scmp.eq.s32.totalorder %s38, 1
      %p68 = por %p66, %p67
      %p69 = scmp.ne.s32.totalorder %s58, %s59
      %p70 = scmp.eq.s32.totalorder %s38, 0
      %p71 = por %p69, %p70
      %p72 = scmp.ne.s32.totalorder %s58, %s59
      %p73 = scmp.eq.s32.totalorder %s39, 1
      %p74 = por %p72, %p73
      %p76 = scmp.ne.s32.totalorder %s59, %s75
      %p77 = scmp.eq.s32.totalorder %s39, 0
      %p78 = por %p76, %p77
      %s79 = ssub.s32 %s40, %s52
      %s80 = ssub.s32 %s41, %s48
      %s81 = sor.u32 %s79, %s80
      %p82 = scmp.eq.s32.totalorder %s81, 0
      %s84 = sadd.s32 %s83, 1
      %s85 = scalar_select %p82, %s83, %s84
      %p88 = pneg %p82
      %p89 = scmp.eq.s32.totalorder %s33, 1
      %p90 = por %p88, %p89
      %p91 = scmp.ne.s32.totalorder %s83, %s86
      %p92 = scmp.eq.s32.totalorder %s33, 0
      %p93 = por %p91, %p92
      %p94 = scmp.ne.s32.totalorder %s83, %s86
      %p95 = scmp.eq.s32.totalorder %s38, 1
      %p96 = por %p94, %p95
      %p97 = scmp.ne.s32.totalorder %s86, %s87
      %p98 = scmp.eq.s32.totalorder %s38, 0
      %p99 = por %p97, %p98
      %p100 = scmp.ne.s32.totalorder %s86, %s87
      %p101 = scmp.eq.s32.totalorder %s39, 1
      %p102 = por %p100, %p101
      %p104 = scmp.ne.s32.totalorder %s87, %s103
      %p105 = scmp.eq.s32.totalorder %s39, 0
      %p106 = por %p104, %p105
      %s108 = sadd.s32 %s107, 1
      %p111 = scmp.eq.s32.totalorder %s33, 1
      %p112 = scmp.ne.s32.totalorder %s107, %s109
      %p113 = scmp.eq.s32.totalorder %s33, 0
      %p114 = por %p112, %p113
      %p115 = scmp.ne.s32.totalorder %s107, %s109
      %p116 = scmp.eq.s32.totalorder %s38, 1
      %p117 = por %p115, %p116
      %p118 = scmp.ne.s32.totalorder %s109, %s110
      %p119 = scmp.eq.s32.totalorder %s38, 0
      %p120 = por %p118, %p119
      %p121 = scmp.ne.s32.totalorder %s109, %s110
      %p122 = scmp.eq.s32.totalorder %s39, 1
      %p123 = por %p121, %p122
      %p125 = scmp.ne.s32.totalorder %s110, %s124
      %p126 = scmp.eq.s32.totalorder %s39, 0
      %p127 = por %p125, %p126
      %s129 = sadd.s32 %s128, 1
      %p132 = scmp.eq.s32.totalorder %s33, 1
      %p133 = scmp.ne.s32.totalorder %s128, %s130
      %p134 = scmp.eq.s32.totalorder %s33, 0
      %p135 = por %p133, %p134
      %p136 = scmp.ne.s32.totalorder %s128, %s130
      %p137 = scmp.eq.s32.totalorder %s38, 1
      %p138 = por %p136, %p137
      %p139 = scmp.ne.s32.totalorder %s130, %s131
      %p140 = scmp.eq.s32.totalorder %s38, 0
      %p141 = por %p139, %p140
      %p142 = scmp.ne.s32.totalorder %s130, %s131
      %p143 = scmp.eq.s32.totalorder %s39, 1
      %p144 = por %p142, %p143
      %p146 = scmp.ne.s32.totalorder %s131, %s145
      %p147 = scmp.eq.s32.totalorder %s39, 0
      %p148 = por %p146, %p147
      %s150 = sadd.s32 %s149, 1
      %p153 = scmp.eq.s32.totalorder %s33, 1
      %p154 = scmp.ne.s32.totalorder %s149, %s151
      %p155 = scmp.eq.s32.totalorder %s33, 0
      %p156 = por %p154, %p155
      %p157 = scmp.ne.s32.totalorder %s149, %s151
      %p158 = scmp.eq.s32.totalorder %s38, 1
      %p159 = por %p157, %p158
      %p160 = scmp.ne.s32.totalorder %s151, %s152
      %p161 = scmp.eq.s32.totalorder %s38, 0
      %p162 = por %p160, %p161
      %p163 = scmp.ne.s32.totalorder %s151, %s152
      %p164 = scmp.eq.s32.totalorder %s39, 1
      %p165 = por %p163, %p164
      %p167 = scmp.ne.s32.totalorder %s152, %s166
      %p168 = scmp.eq.s32.totalorder %s39, 0
      %p169 = por %p167, %p168
      %s171 = sadd.s32 %s170, 1
      %p174 = scmp.eq.s32.totalorder %s33, 1
      %p175 = scmp.ne.s32.totalorder %s170, %s172
      %p176 = scmp.eq.s32.totalorder %s33, 0
      %p177 = por %p175, %p176
      %p178 = scmp.ne.s32.totalorder %s170, %s172
      %p179 = scmp.eq.s32.totalorder %s38, 1
      %p180 = por %p178, %p179
      %p181 = scmp.ne.s32.totalorder %s172, %s173
      %p182 = scmp.eq.s32.totalorder %s38, 0
      %p183 = por %p181, %p182
      %p184 = scmp.ne.s32.totalorder %s172, %s173
      %p185 = scmp.eq.s32.totalorder %s39, 1
      %p186 = por %p184, %p185
      %p188 = scmp.ne.s32.totalorder %s173, %s187
      %p189 = scmp.eq.s32.totalorder %s39, 0
      %p190 = por %p188, %p189
      %s192 = sadd.s32 %s191, 1
      %p195 = scmp.eq.s32.totalorder %s33, 1
      %p196 = scmp.ne.s32.totalorder %s191, %s193
      %p197 = scmp.eq.s32.totalorder %s33, 0
      %p198 = por %p196, %p197
      %p199 = scmp.ne.s32.totalorder %s191, %s193
      %p200 = scmp.eq.s32.totalorder %s38, 1
      %p201 = por %p199, %p200
      %p202 = scmp.ne.s32.totalorder %s193, %s194
      %p203 = scmp.eq.s32.totalorder %s38, 0
      %p204 = por %p202, %p203
      %p205 = scmp.ne.s32.totalorder %s193, %s194
      %p206 = scmp.eq.s32.totalorder %s39, 1
      %p207 = por %p205, %p206
      %p209 = scmp.ne.s32.totalorder %s194, %s208
      %p210 = scmp.eq.s32.totalorder %s39, 0
      %p211 = por %p209, %p210
      %s213 = sadd.s32 %s212, 1
      %p216 = scmp.eq.s32.totalorder %s33, 1
      %p217 = scmp.ne.s32.totalorder %s212, %s214
      %p218 = scmp.eq.s32.totalorder %s33, 0
      %p219 = por %p217, %p218
      %p220 = scmp.ne.s32.totalorder %s212, %s214
      %p221 = scmp.eq.s32.totalorder %s38, 1
      %p222 = por %p220, %p221
      %p223 = scmp.ne.s32.totalorder %s214, %s215
      %p224 = scmp.eq.s32.totalorder %s38, 0
      %p225 = por %p223, %p224
      %p226 = scmp.ne.s32.totalorder %s214, %s215
      %p227 = scmp.eq.s32.totalorder %s39, 1
      %p228 = por %p226, %p227
      %p230 = scmp.ne.s32.totalorder %s215, %s229
      %p231 = scmp.eq.s32.totalorder %s39, 0
      %p232 = por %p230, %p231
      %s234 = sadd.s32 %s233, 1
      %p237 = scmp.eq.s32.totalorder %s33, 1
      %p238 = scmp.ne.s32.totalorder %s233, %s235
      %p239 = scmp.eq.s32.totalorder %s33, 0
      %p240 = por %p238, %p239
      %p241 = scmp.ne.s32.totalorder %s233, %s235
      %p242 = scmp.eq.s32.totalorder %s38, 1
      %p243 = por %p241, %p242
      %p244 = scmp.ne.s32.totalorder %s235, %s236
      %p245 = scmp.eq.s32.totalorder %s38, 0
      %p246 = por %p244, %p245
      %p247 = scmp.ne.s32.totalorder %s235, %s236
      %p248 = scmp.eq.s32.totalorder %s39, 1
      %p249 = por %p247, %p248
      %p251 = scmp.ne.s32.totalorder %s236, %s250
      %p252 = scmp.eq.s32.totalorder %s39, 0
      %p253 = por %p251, %p252
      %s255 = sadd.s32 %s254, 1
      %p258 = scmp.eq.s32.totalorder %s33, 1
      %p259 = scmp.ne.s32.totalorder %s254, %s256
      %p260 = scmp.eq.s32.totalorder %s33, 0
      %p261 = por %p259, %p260
      %p262 = scmp.ne.s32.totalorder %s254, %s256
      %p263 = scmp.eq.s32.totalorder %s38, 1
      %p264 = por %p262, %p263
      %p265 = scmp.ne.s32.totalorder %s256, %s257
      %p266 = scmp.eq.s32.totalorder %s38, 0
      %p267 = por %p265, %p266
      %p268 = scmp.ne.s32.totalorder %s256, %s257
      %p269 = scmp.eq.s32.totalorder %s39, 1
      %p270 = por %p268, %p269
      %p272 = scmp.ne.s32.totalorder %s257, %s271
      %p273 = scmp.eq.s32.totalorder %s39, 0
      %p274 = por %p272, %p273
      %s276 = sadd.s32 %s275, 1
      %p279 = scmp.eq.s32.totalorder %s33, 1
      %p280 = scmp.ne.s32.totalorder %s275, %s277
      %p281 = scmp.eq.s32.totalorder %s33, 0
      %p282 = por %p280, %p281
      %p283 = scmp.ne.s32.totalorder %s275, %s277
      %p284 = scmp.eq.s32.totalorder %s38, 1
      %p285 = por %p283, %p284
      %p286 = scmp.ne.s32.totalorder %s277, %s278
      %p287 = scmp.eq.s32.totalorder %s38, 0
      %p288 = por %p286, %p287
      %p289 = scmp.ne.s32.totalorder %s277, %s278
      %p290 = scmp.eq.s32.totalorder %s39, 1
      %p291 = por %p289, %p290
      %p293 = scmp.ne.s32.totalorder %s278, %s292
      %p294 = scmp.eq.s32.totalorder %s39, 0
      %p295 = por %p293, %p294
      %s296 = ssub.s32 %s40, %s52
      %p297 = scmp.eq.s32.totalorder %s296, 0
      %s299 = sadd.s32 %s298, 1
      %s300 = scalar_select %p297, %s298, %s299
      %p303 = pneg %p297
      %p304 = scmp.eq.s32.totalorder %s33, 1
      %p305 = por %p303, %p304
      %p306 = scmp.ne.s32.totalorder %s298, %s301
      %p307 = scmp.eq.s32.totalorder %s33, 0
      %p308 = por %p306, %p307
      %p309 = scmp.ne.s32.totalorder %s298, %s301
      %p310 = scmp.eq.s32.totalorder %s38, 1
      %p311 = por %p309, %p310
      %p312 = scmp.ne.s32.totalorder %s301, %s302
      %p313 = scmp.eq.s32.totalorder %s38, 0
      %p314 = por %p312, %p313
      %p315 = scmp.ne.s32.totalorder %s301, %s302
      %p316 = scmp.eq.s32.totalorder %s39, 1
      %p317 = por %p315, %p316
      %p319 = scmp.ne.s32.totalorder %s302, %s318
      %p320 = scmp.eq.s32.totalorder %s39, 0
      %p321 = por %p319, %p320
      %s322 = ssub.s32 %s40, %s52
      %s323 = ssub.s32 %s41, %s48
      %s324 = sor.u32 %s322, %s323
      %p325 = scmp.eq.s32.totalorder %s324, 0
      %s327 = sadd.s32 %s326, 1
      %s328 = scalar_select %p325, %s326, %s327
      %p331 = pneg %p325
      %p332 = scmp.eq.s32.totalorder %s33, 1
      %p333 = por %p331, %p332
      %p334 = scmp.ne.s32.totalorder %s326, %s329
      %p335 = scmp.eq.s32.totalorder %s33, 0
      %p336 = por %p334, %p335
      %p337 = scmp.ne.s32.totalorder %s326, %s329
      %p338 = scmp.eq.s32.totalorder %s38, 1
      %p339 = por %p337, %p338
      %p340 = scmp.ne.s32.totalorder %s329, %s330
      %p341 = scmp.eq.s32.totalorder %s38, 0
      %p342 = por %p340, %p341
      %p343 = scmp.ne.s32.totalorder %s329, %s330
      %p344 = scmp.eq.s32.totalorder %s39, 1
      %p345 = por %p343, %p344
      %p347 = scmp.ne.s32.totalorder %s330, %s346
      %p348 = scmp.eq.s32.totalorder %s39, 0
      %p349 = por %p347, %p348
      %p350 = scmp.le.s32.totalorder 1, %s33
      %p351 = scmp.lt.s32.totalorder %s33, 3
      %p352 = pnand %p350, %p351
      %p353 = pneg %p352
      // Predicated region
      $region9: #{tpu_custom_call.1} parent=5 // pred_check
        _
      $region10: #{tpu_custom_call.1} parent=5 // pred_check_branch
        %355 = sbr.rel (%p352) target = $region12
      $region11: #{tpu_custom_call.1} parent=5 // pred_region
        %s356 = ssub.s32 %s33, 1
        // Predicated region
        $region13: #{tpu_custom_call.1} parent=11 // pred_check
          %p357 = pneg %p120
        $region14: #{tpu_custom_call.1} parent=11 // pred_check_branch
          %359 = sbr.rel (%p357) target = $region16
        $region15: #{tpu_custom_call.1} parent=11 // pred_region
          _
        $region16: #{tpu_custom_call.1} parent=11 // pred_fallthru
          _
        // Predicated region
        $region17: #{tpu_custom_call.1} parent=11 // pred_check
          %p360 = pneg %p141
        $region18: #{tpu_custom_call.1} parent=11 // pred_check_branch
          %362 = sbr.rel (%p360) target = $region20
        $region19: #{tpu_custom_call.1} parent=11 // pred_region
          %s364 = ssub.s32 16, 16
          %365 = vsyncadd [#allocation12], %s364
          %s367 = sshll.u32 [#allocation13], 4
          %s368 = int_to_ptr.vmem [resolvable:$true] %s367
          %370 = dma.hbm_to_vmem [thread:$0]  %s3, 16, %s368, [#allocation12]
        $region20: #{tpu_custom_call.1} parent=11 // pred_fallthru
          _
        // Predicated region
        $region21: #{tpu_custom_call.1} parent=11 // pred_check
          %p371 = pneg %p162
        $region22: #{tpu_custom_call.1} parent=11 // pred_check_branch
          %373 = sbr.rel (%p371) target = $region24
        $region23: #{tpu_custom_call.1} parent=11 // pred_region
          %s375 = ssub.s32 512, 512
          %376 = vsyncadd [#allocation15], %s375
          %s377 = sshll.u32 [#allocation14], 4
          %s378 = int_to_ptr.vmem [resolvable:$true] %s377
          %383 = dma.hbm_to_vmem [thread:$0]  %s4, 512, %s378, [#allocation15], 128, 128, 8
        $region24: #{tpu_custom_call.1} parent=11 // pred_fallthru
          _
        // Predicated region
        $region25: #{tpu_custom_call.1} parent=11 // pred_check
          %p384 = pneg %p183
        $region26: #{tpu_custom_call.1} parent=11 // pred_check_branch
          %386 = sbr.rel (%p384) target = $region28
        $region27: #{tpu_custom_call.1} parent=11 // pred_region
          _
        $region28: #{tpu_custom_call.1} parent=11 // pred_fallthru
          _
        // Predicated region
        $region29: #{tpu_custom_call.1} parent=11 // pred_check
          %p387 = pneg %p204
        $region30: #{tpu_custom_call.1} parent=11 // pred_check_branch
          %389 = sbr.rel (%p387) target = $region32
        $region31: #{tpu_custom_call.1} parent=11 // pred_region
          %s391 = ssub.s32 512, 512
          %392 = vsyncadd [#allocation15], %s391
          %s393 = sshll.u32 [#allocation16], 4
          %s394 = int_to_ptr.vmem [resolvable:$true] %s393
          %399 = dma.hbm_to_vmem [thread:$0]  %s6, 512, %s394, [#allocation15], 128, 128, 8
        $region32: #{tpu_custom_call.1} parent=11 // pred_fallthru
          _
        // Predicated region
        $region33: #{tpu_custom_call.1} parent=11 // pred_check
          %p400 = pneg %p225
        $region34: #{tpu_custom_call.1} parent=11 // pred_check_branch
          %402 = sbr.rel (%p400) target = $region36
        $region35: #{tpu_custom_call.1} parent=11 // pred_region
          %s404 = ssub.s32 1024, 1024
          %405 = vsyncadd [#allocation18], %s404
          %s406 = sshll.u32 [#allocation17], 4
          %s407 = int_to_ptr.vmem [resolvable:$true] %s406
          %412 = dma.hbm_to_vmem [thread:$0]  %s7, 1024, %s407, [#allocation18], 256, 256, 16
        $region36: #{tpu_custom_call.1} parent=11 // pred_fallthru
          _
        // Predicated region
        $region37: #{tpu_custom_call.1} parent=11 // pred_check
          %p413 = pneg %p246
        $region38: #{tpu_custom_call.1} parent=11 // pred_check_branch
          %415 = sbr.rel (%p413) target = $region40
        $region39: #{tpu_custom_call.1} parent=11 // pred_region
          _
        $region40: #{tpu_custom_call.1} parent=11 // pred_fallthru
          _
        // Predicated region
        $region41: #{tpu_custom_call.1} parent=11 // pred_check
          %p416 = pneg %p267
        $region42: #{tpu_custom_call.1} parent=11 // pred_check_branch
          %418 = sbr.rel (%p416) target = $region44
        $region43: #{tpu_custom_call.1} parent=11 // pred_region
          _
        $region44: #{tpu_custom_call.1} parent=11 // pred_fallthru
          _
        // Predicated region
        $region45: #{tpu_custom_call.1} parent=11 // pred_check
          %p419 = pneg %p288
        $region46: #{tpu_custom_call.1} parent=11 // pred_check_branch
          %421 = sbr.rel (%p419) target = $region48
        $region47: #{tpu_custom_call.1} parent=11 // pred_region
          %s423 = ssub.s32 512, 512
          %424 = vsyncadd [#allocation18], %s423
          %s425 = sshll.u32 [#allocation19], 4
          %s426 = int_to_ptr.vmem [resolvable:$true] %s425
          %431 = dma.hbm_to_vmem [thread:$0]  %s10, 512, %s426, [#allocation18], 128, 128, 8
        $region48: #{tpu_custom_call.1} parent=11 // pred_fallthru
          _
      $region12: #{tpu_custom_call.1} parent=5 // pred_fallthru
        _
      %p432 = scmp.lt.s32.totalorder %s33, 2
      // Predicated region
      $region49: #{tpu_custom_call.1} parent=5 // pred_check
        %p433 = pneg %p432
      $region50: #{tpu_custom_call.1} parent=5 // pred_check_branch
        %435 = sbr.rel (%p433) target = $region52
      $region51: #{tpu_custom_call.1} parent=5 // pred_region
        // Predicated region
        $region53: #{tpu_custom_call.1} parent=51 // pred_check
          %p436 = pneg %p65
        $region54: #{tpu_custom_call.1} parent=51 // pred_check_branch
          %438 = sbr.rel (%p436) target = $region56
        $region55: #{tpu_custom_call.1} parent=51 // pred_region
          %s439 = sand.u32 %s55, 1
          %s440 = scalar_lea.sflag [#allocation9], %s439
          %s441 = sand.u32 %s55, 1
          %s442 = smul.addr %s441, 16
          %s443 = scalar_lea.vmem [#allocation8], %s442
          %s445 = ssub.s32 256, 256
          %446 = vsyncadd %s440, %s445
          %s447 = smul.addr %s40, 2
          %s448 = smul.addr %s447, 128
          %s449 = scalar_lea.hbm %s0, %s448
          %s450 = sshll.u32 %s443, 4
          %s451 = int_to_ptr.vmem [resolvable:$true] %s450
          %456 = dma.hbm_to_vmem [thread:$0]  %s449, 256, %s451, %s440, 128, 128, 8
        $region56: #{tpu_custom_call.1} parent=51 // pred_fallthru
          _
        // Predicated region
        $region57: #{tpu_custom_call.1} parent=51 // pred_check
          %p457 = pneg %p93
        $region58: #{tpu_custom_call.1} parent=51 // pred_check_branch
          %459 = sbr.rel (%p457) target = $region60
        $region59: #{tpu_custom_call.1} parent=51 // pred_region
          %s460 = sand.u32 %s33, 1
          %s461 = scalar_lea.sflag [#allocation12], %s460
          %s462 = sand.u32 %s83, 1
          %s463 = smul.addr %s462, 256
          %s464 = scalar_lea.vmem [#allocation11], %s463
          %s465 = smul.u32 16, %s41
          %s467 = ssub.s32 4096, 4096
          %468 = vsyncadd %s461, %s467
          %s469 = smul.addr %s465, 2
          %s470 = smul.addr %s40, 32
          %s471 = sadd.s32 %s469, %s470
          %s472 = smul.addr %s471, 128
          %s473 = scalar_lea.hbm %s1, %s472
          %s474 = sshll.u32 %s464, 4
          %s475 = int_to_ptr.vmem [resolvable:$true] %s474
          %480 = dma.hbm_to_vmem [thread:$0]  %s473, 4096, %s475, %s461, 128, 128, 8
        $region60: #{tpu_custom_call.1} parent=51 // pred_fallthru
          _
      $region52: #{tpu_custom_call.1} parent=5 // pred_fallthru
        _
      %p481 = scmp.le.s32.totalorder 1, %s33
      %p482 = scmp.lt.s32.totalorder %s33, 3
      %p483 = pnand %p481, %p482
      %p484 = pneg %p483
      // Predicated region
      $region61: #{tpu_custom_call.1} parent=5 // pred_check
        _
      $region62: #{tpu_custom_call.1} parent=5 // pred_check_branch
        %486 = sbr.rel (%p483) target = $region64
      $region63: #{tpu_custom_call.1} parent=5 // pred_region
        %s487 = ssub.s32 %s33, 1
        %s488 = sand.u32 %s58, 1
        %s489 = scalar_lea.sflag [#allocation9], %s488
        %s490 = sand.u32 %s58, 1
        %s491 = smul.addr %s490, 16
        %s492 = scalar_lea.vmem [#allocation8], %s491
        // Predicated region
        $region65: #{tpu_custom_call.1} parent=63 // pred_check
          %p493 = pneg %p71
        $region66: #{tpu_custom_call.1} parent=63 // pred_check_branch
          %495 = sbr.rel (%p493) target = $region68
        $region67: #{tpu_custom_call.1} parent=63 // pred_region
          %496 = dma.done %s489, 256
        $region68: #{tpu_custom_call.1} parent=63 // pred_fallthru
          _
        %s497 = sand.u32 %s38, 1
        %s498 = scalar_lea.sflag [#allocation12], %s497
        %s499 = sand.u32 %s86, 1
        %s500 = smul.addr %s499, 256
        %s501 = scalar_lea.vmem [#allocation11], %s500
        // Predicated region
        $region69: #{tpu_custom_call.1} parent=63 // pred_check
          %p502 = pneg %p99
        $region70: #{tpu_custom_call.1} parent=63 // pred_check_branch
          %504 = sbr.rel (%p502) target = $region72
        $region71: #{tpu_custom_call.1} parent=63 // pred_region
          %505 = dma.done %s498, 4096
        $region72: #{tpu_custom_call.1} parent=63 // pred_fallthru
          _
        // Predicated region
        $region73: #{tpu_custom_call.1} parent=63 // pred_check
          %p506 = pneg %p141
        $region74: #{tpu_custom_call.1} parent=63 // pred_check_branch
          %508 = sbr.rel (%p506) target = $region76
        $region75: #{tpu_custom_call.1} parent=63 // pred_region
          %509 = dma.done [#allocation12], 16
        $region76: #{tpu_custom_call.1} parent=63 // pred_fallthru
          _
        // Predicated region
        $region77: #{tpu_custom_call.1} parent=63 // pred_check
          %p510 = pneg %p162
        $region78: #{tpu_custom_call.1} parent=63 // pred_check_branch
          %512 = sbr.rel (%p510) target = $region80
        $region79: #{tpu_custom_call.1} parent=63 // pred_region
          %513 = dma.done [#allocation15], 512
        $region80: #{tpu_custom_call.1} parent=63 // pred_fallthru
          _
        // Predicated region
        $region81: #{tpu_custom_call.1} parent=63 // pred_check
          %p514 = pneg %p204
        $region82: #{tpu_custom_call.1} parent=63 // pred_check_branch
          %516 = sbr.rel (%p514) target = $region84
        $region83: #{tpu_custom_call.1} parent=63 // pred_region
          %517 = dma.done [#allocation15], 512
        $region84: #{tpu_custom_call.1} parent=63 // pred_fallthru
          _
        // Predicated region
        $region85: #{tpu_custom_call.1} parent=63 // pred_check
          %p518 = pneg %p225
        $region86: #{tpu_custom_call.1} parent=63 // pred_check_branch
          %520 = sbr.rel (%p518) target = $region88
        $region87: #{tpu_custom_call.1} parent=63 // pred_region
          %521 = dma.done [#allocation18], 1024
        $region88: #{tpu_custom_call.1} parent=63 // pred_fallthru
          _
        // Predicated region
        $region89: #{tpu_custom_call.1} parent=63 // pred_check
          %p522 = pneg %p288
        $region90: #{tpu_custom_call.1} parent=63 // pred_check_branch
          %524 = sbr.rel (%p522) target = $region92
        $region91: #{tpu_custom_call.1} parent=63 // pred_region
          %525 = dma.done [#allocation18], 512
        $region92: #{tpu_custom_call.1} parent=63 // pred_fallthru
          _
        %s526 = sand.u32 %s58, 1
        %s527 = scalar_lea.sflag [#allocation9], %s526
        %s528 = sand.u32 %s58, 1
        %s529 = smul.addr %s528, 16
        %s530 = scalar_lea.vmem [#allocation8], %s529
        %p531 = pneg %p71
        %p532 = pneg %p68
        %s533 = sand.u32 %s38, 1
        %s534 = scalar_lea.sflag [#allocation12], %s533
        %s535 = sand.u32 %s86, 1
        %s536 = smul.addr %s535, 256
        %s537 = scalar_lea.vmem [#allocation11], %s536
        %p538 = pneg %p99
        %p539 = pneg %p96
        %p540 = pneg %p120
        %p541 = pneg %p117
        %p542 = pneg %p141
        %p543 = pneg %p138
        %p544 = pneg %p162
        %p545 = pneg %p159
        %p546 = pneg %p183
        %p547 = pneg %p180
        %p548 = pneg %p204
        %p549 = pneg %p201
        %p550 = pneg %p225
        %p551 = pneg %p222
        %p552 = pneg %p246
        %p553 = pneg %p243
        %p554 = pneg %p267
        %p555 = pneg %p264
        %p556 = pneg %p288
        %p557 = pneg %p285
        %p558 = pneg %p314
        %p559 = pneg %p311
        %s560 = sand.u32 %s301, 1
        %s561 = scalar_lea.sflag [#allocation10], %s560
        %s562 = sand.u32 %s301, 1
        %s563 = smul.addr %s562, 16
        %s564 = scalar_lea.vmem [#allocation20], %s563
        %p565 = pneg %p342
        %p566 = pneg %p339
        %s567 = sand.u32 %s329, 1
        %s568 = scalar_lea.sflag [#allocation22], %s567
        %s569 = sand.u32 %s329, 1
        %s570 = smul.addr %s569, 256
        %s571 = scalar_lea.vmem [#allocation21], %s570
        %s572 = smul.u32 16, %s43
        %s573 = smul.u32 16, %s43
        %v574 = vld [vmem:[%s2] sm:$0x1]
        %v575 = vld [vmem:[#allocation13] sm:$0x1]
        %p576 = scmp.eq.s32.totalorder %s43, 0
        // Predicated region
        $region93: #{tpu_custom_call.1} parent=63 // pred_check
          %p577 = pneg %p576
        $region94: #{tpu_custom_call.1} parent=63 // pred_check_branch
          %579 = sbr.rel (%p577) target = $region96
        $region95: #{tpu_custom_call.1} parent=63 // pred_region
          %v580 = vld [vmem:[%s492] sm:$0xff]
          %v581 = vld [vmem:[%s492 + $0x8] sm:$0xff]
          %vm582 = vcmask 261120
          %v583 = vsel %vm582, %v580, 0.0
          %584 = vadd.xlane.f32.xlu0 %v583
          %v585 = vpop.xlane.xlu0 %584
          %v586 = vsel %vm582, %v581, 0.0
          %587 = vadd.xlane.f32.xlu0 %v586
          %v588 = vpop.xlane.xlu0 %587
          %v589 = vrcp.pop 32.0
          %v590 = vmul.f32 %v585, %v589
          %v591 = vmul.f32 %v588, %v589
          %v592 = vsub.f32 %v580, %v590
          %v593 = vsub.f32 %v581, %v591
          %v594 = vmul.f32 %v592, %v592
          %v595 = vmul.f32 %v593, %v593
          %v596 = vsel %vm582, %v594, 0.0
          %597 = vadd.xlane.f32.xlu0 %v596
          %v598 = vpop.xlane.xlu0 %597
          %v599 = vsel %vm582, %v595, 0.0
          %600 = vadd.xlane.f32.xlu0 %v599
          %v601 = vpop.xlane.xlu0 %600
          %v602 = vmul.f32 %v598, %v589
          %v603 = vmul.f32 %v601, %v589
          %v604 = vadd.f32 %v602, 1e-05
          %v605 = vadd.f32 %v603, 1e-05
          %v606 = vrsqrt.pop %v604
          %v607 = vrsqrt.pop %v605
          %v608 = vmul.f32 %v592, %v606
          %v609 = vmul.f32 %v593, %v607
          %v611 = vlaneseq
          %v612 = vshrl.u32 %v611, 7
          %v613 = vsub.s32 0, %v612
          %v614 = vrot.slane %v574, %v613
          %v616 = vmul.f32 %v608, %v614
          %v617 = vmul.f32 %v609, %v614
          %v619 = vlaneseq
          %v620 = vshrl.u32 %v619, 7
          %v621 = vsub.s32 0, %v620
          %v622 = vrot.slane %v575, %v621
          %v624 = vadd.f32 %v616, %v622
          %v625 = vadd.f32 %v617, %v622
          %v626 = vld [vmem:[#allocation14] sm:$0xff]
          %v627 = vld [vmem:[#allocation14 + $0x8] sm:$0xff]
          %v628 = vld [vmem:[#allocation14 + $0x10] sm:$0xff]
          %v629 = vld [vmem:[#allocation14 + $0x18] sm:$0xff]
          %v630 = vld [vmem:[%s5] sm:$0x1]
          %v632 = vlaneseq
          %v633 = vshrl.u32 %v632, 7
          %v634 = vsub.s32 0, %v633
          %v635 = vrot.slane %v630, %v634
          %v638 = vsel %vm582, %v624, 0
          %v641 = vsel %vm582, %v625, 0
          %643 = vmatprep.subr.mxu0 0.0
          %644 = vmatpush1.msra.mxu0 0.0
          %645 = vmatprep.subr.mxu0 0.0
          %646 = vmatpush1.msra.mxu0 0.0
          %647 = vmatprep.subr.mxu0 0.0
          %648 = vmatpush1.msra.mxu0 0.0
          %649 = vmatprep.subr.mxu0 0.0
          %650 = vmatpush1.msra.mxu0 0.0
          %651 = vmatprep.subr.mxu0 0.0
          %652 = vmatpush1.msra.mxu0 0.0
          %653 = vmatprep.subr.mxu0 0.0
          %654 = vmatpush1.msra.mxu0 0.0
          %655 = vmatprep.subr.mxu0 0.0
          %656 = vmatpush1.msra.mxu0 0.0
          %657 = vmatprep.subr.mxu0 0.0
          %658 = vmatpush1.msra.mxu0 0.0
          %659 = vmatprep.subr.mxu0 0.0
          %660 = vmatpush1.msra.mxu0 0.0
          %661 = vmatprep.subr.mxu0 0.0
          %662 = vmatpush1.msra.mxu0 0.0
          %663 = vmatprep.subr.mxu0 0.0
          %664 = vmatpush1.msra.mxu0 0.0
          %665 = vmatprep.subr.mxu0 0.0
          %666 = vmatpush1.msra.mxu0 0.0
          %667 = vmatprep.subr.mxu0 0.0
          %668 = vmatpush1.msra.mxu0 %v629
          %669 = vmatprep.subr.mxu0 0.0
          %670 = vmatpush1.msra.mxu0 %v628
          %671 = vmatprep.subr.mxu0 0.0
          %672 = vmatpush1.msra.mxu0 %v627
          %673 = vmatprep.subr.mxu0 0.0
          %674 = vmatpush1.msra.mxu0 %v626
          %675 = vmatprep.subr.mxu0 0.0
          %676 = vmatpush2.msra.mxu0 0.0
          %677 = vmatprep.subr.mxu0 0.0
          %678 = vmatpush2.msra.mxu0 0.0
          %679 = vmatprep.subr.mxu0 0.0
          %680 = vmatpush2.msra.mxu0 0.0
          %681 = vmatprep.subr.mxu0 0.0
          %682 = vmatpush2.msra.mxu0 0.0
          %683 = vmatprep.subr.mxu0 0.0
          %684 = vmatpush2.msra.mxu0 0.0
          %685 = vmatprep.subr.mxu0 0.0
          %686 = vmatpush2.msra.mxu0 0.0
          %687 = vmatprep.subr.mxu0 0.0
          %688 = vmatpush2.msra.mxu0 0.0
          %689 = vmatprep.subr.mxu0 0.0
          %690 = vmatpush2.msra.mxu0 0.0
          %691 = vmatprep.subr.mxu0 0.0
          %692 = vmatpush2.msra.mxu0 0.0
          %693 = vmatprep.subr.mxu0 0.0
          %694 = vmatpush2.msra.mxu0 0.0
          %695 = vmatprep.subr.mxu0 0.0
          %696 = vmatpush2.msra.mxu0 0.0
          %697 = vmatprep.subr.mxu0 0.0
          %698 = vmatpush2.msra.mxu0 0.0
          %699 = vmatprep.subr.mxu0 0.0
          %700 = vmatpush2.msra.mxu0 0.0
          %701 = vmatprep.subr.mxu0 0.0
          %702 = vmatpush2.msra.mxu0 0.0
          %703 = vmatprep.subr.mxu0 0.0
          %704 = vmatpush2.msra.mxu0 0.0
          %705 = vmatprep.subr.mxu0 0.0
          %706 = vmatpush2.msra.mxu0 0.0
          %707 = vmatprep.mubr.f32.mxu0 0.0
          %708 = vmatmul.mubr.f32.gmra.mxu0 %v638
          %v709 = vpop.f32.mrf.mxu0
          %v710 = vadd.f32 %v635, %v709
          %v711 = vpop.f32.mrf.mxu0
          %712 = vmatprep.mubr.f32.mxu0 0.0
          %713 = vmatmul.mubr.f32.gmra.mxu0 %v641
          %v714 = vpop.f32.mrf.mxu0
          %v715 = vadd.f32 %v635, %v714
          %v716 = vpop.f32.mrf.mxu0
          %717 = vdwg.mxu0
          %720 = vrot.lane.b32.xlu0 %v710, 96
          %v721 = vpop.permute.xlu0 %720
          %722 = vrot.lane.b32.xlu0 %v715, 96
          %v723 = vpop.permute.xlu0 %722
          %v726 = vmul.f32 %v710, %v721
          %v727 = vmul.f32 %v715, %v723
          %v728 = vld [vmem:[#allocation16] sm:$0xff]
          %v729 = vld [vmem:[#allocation16 + $0x8] sm:$0xff]
          %v730 = vld [vmem:[#allocation16 + $0x10] sm:$0xff]
          %v731 = vld [vmem:[#allocation16 + $0x18] sm:$0xff]
          %v733 = vsel %vm582, %v726, 0
          %v736 = vsel %vm582, %v727, 0
          %738 = vmatprep.subr.mxu0 0.0
          %739 = vmatpush1.msra.mxu0 0.0
          %740 = vmatprep.subr.mxu0 0.0
          %741 = vmatpush1.msra.mxu0 0.0
          %742 = vmatprep.subr.mxu0 0.0
          %743 = vmatpush1.msra.mxu0 0.0
          %744 = vmatprep.subr.mxu0 0.0
          %745 = vmatpush1.msra.mxu0 0.0
          %746 = vmatprep.subr.mxu0 0.0
          %747 = vmatpush1.msra.mxu0 0.0
          %748 = vmatprep.subr.mxu0 0.0
          %749 = vmatpush1.msra.mxu0 0.0
          %750 = vmatprep.subr.mxu0 0.0
          %751 = vmatpush1.msra.mxu0 0.0
          %752 = vmatprep.subr.mxu0 0.0
          %753 = vmatpush1.msra.mxu0 0.0
          %754 = vmatprep.subr.mxu0 0.0
          %755 = vmatpush1.msra.mxu0 0.0
          %756 = vmatprep.subr.mxu0 0.0
          %757 = vmatpush1.msra.mxu0 0.0
          %758 = vmatprep.subr.mxu0 0.0
          %759 = vmatpush1.msra.mxu0 0.0
          %760 = vmatprep.subr.mxu0 0.0
          %761 = vmatpush1.msra.mxu0 0.0
          %762 = vmatprep.subr.mxu0 0.0
          %763 = vmatpush1.msra.mxu0 %v731
          %764 = vmatprep.subr.mxu0 0.0
          %765 = vmatpush1.msra.mxu0 %v730
          %766 = vmatprep.subr.mxu0 0.0
          %767 = vmatpush1.msra.mxu0 %v729
          %768 = vmatprep.subr.mxu0 0.0
          %769 = vmatpush1.msra.mxu0 %v728
          %770 = vmatprep.subr.mxu0 0.0
          %771 = vmatpush2.msra.mxu0 0.0
          %772 = vmatprep.subr.mxu0 0.0
          %773 = vmatpush2.msra.mxu0 0.0
          %774 = vmatprep.subr.mxu0 0.0
          %775 = vmatpush2.msra.mxu0 0.0
          %776 = vmatprep.subr.mxu0 0.0
          %777 = vmatpush2.msra.mxu0 0.0
          %778 = vmatprep.subr.mxu0 0.0
          %779 = vmatpush2.msra.mxu0 0.0
          %780 = vmatprep.subr.mxu0 0.0
          %781 = vmatpush2.msra.mxu0 0.0
          %782 = vmatprep.subr.mxu0 0.0
          %783 = vmatpush2.msra.mxu0 0.0
          %784 = vmatprep.subr.mxu0 0.0
          %785 = vmatpush2.msra.mxu0 0.0
          %786 = vmatprep.subr.mxu0 0.0
          %787 = vmatpush2.msra.mxu0 0.0
          %788 = vmatprep.subr.mxu0 0.0
          %789 = vmatpush2.msra.mxu0 0.0
          %790 = vmatprep.subr.mxu0 0.0
          %791 = vmatpush2.msra.mxu0 0.0
          %792 = vmatprep.subr.mxu0 0.0
          %793 = vmatpush2.msra.mxu0 0.0
          %794 = vmatprep.subr.mxu0 0.0
          %795 = vmatpush2.msra.mxu0 0.0
          %796 = vmatprep.subr.mxu0 0.0
          %797 = vmatpush2.msra.mxu0 0.0
          %798 = vmatprep.subr.mxu0 0.0
          %799 = vmatpush2.msra.mxu0 0.0
          %800 = vmatprep.subr.mxu0 0.0
          %801 = vmatpush2.msra.mxu0 0.0
          %802 = vmatprep.mubr.f32.mxu0 0.0
          %803 = vmatmul.mubr.f32.gmra.mxu0 %v733
          %v804 = vpop.f32.mrf.mxu0
          %v805 = vadd.f32 0.0, %v804
          %v806 = vpop.f32.mrf.mxu0
          %807 = vmatprep.mubr.f32.mxu0 0.0
          %808 = vmatmul.mubr.f32.gmra.mxu0 %v736
          %v809 = vpop.f32.mrf.mxu0
          %v810 = vadd.f32 0.0, %v809
          %v811 = vpop.f32.mrf.mxu0
          %812 = vdwg.mxu0
          %v813 = vxor.u32 %v805, 2147483648
          %v814 = vxor.u32 %v810, 2147483648
          %v815 = vmul.f32 %v813, 1.442695
          %v816 = vpow.pop %v815
          %v817 = vmul.f32 %v814, 1.442695
          %v818 = vpow.pop %v817
          %v819 = vadd.f32 %v816, 1.0
          %v820 = vadd.f32 %v818, 1.0
          %v821 = vrcp.pop %v819
          %v822 = vmul.f32 1.0, %v821
          %v823 = vrcp.pop %v820
          %v824 = vmul.f32 1.0, %v823
          %v825 = vmul.f32 %v805, %v822
          %v826 = vmul.f32 %v810, %v824
          %829 = vrot.lane.b32.xlu0 %v825, 64
          %v830 = vpop.permute.xlu0 %829
          %831 = vrot.lane.b32.xlu0 %v826, 64
          %v832 = vpop.permute.xlu0 %831
          %v835 = vmul.f32 %v710, %v830
          %v836 = vmul.f32 %v715, %v832
          %v837 = vld [vmem:[#allocation17] sm:$0xff]
          %v838 = vld [vmem:[#allocation17 + $0x8] sm:$0xff]
          %v839 = vld [vmem:[#allocation17 + $0x10] sm:$0xff]
          %v840 = vld [vmem:[#allocation17 + $0x18] sm:$0xff]
          %v841 = vld [vmem:[#allocation17 + $0x20] sm:$0xff]
          %v842 = vld [vmem:[#allocation17 + $0x28] sm:$0xff]
          %v843 = vld [vmem:[#allocation17 + $0x30] sm:$0xff]
          %v844 = vld [vmem:[#allocation17 + $0x38] sm:$0xff]
          %v845 = vld [vmem:[%s8] sm:$0x3]
          %v847 = vlaneseq
          %v848 = vshrl.u32 %v847, 7
          %v849 = vsub.s32 0, %v848
          %v850 = vrot.slane %v845, %v849
          %v851 = vlaneseq
          %v852 = vshrl.u32 %v851, 7
          %v853 = vsub.s32 1, %v852
          %v854 = vrot.slane %v845, %v853
          %859 = vrot.lane.b32.xlu0 %v835, 64
          %v860 = vpop.permute.xlu0 %859
          %861 = vrot.lane.b32.xlu0 %v836, 64
          %v862 = vpop.permute.xlu0 %861
          %v863 = vsel %vm582, %v860, 0
          %v865 = vsel %vm582, %v862, 0
          %867 = vmatprep.subr.mxu0 0.0
          %868 = vmatpush1.msra.mxu0 0.0
          %869 = vmatprep.subr.mxu0 0.0
          %870 = vmatpush1.msra.mxu0 0.0
          %871 = vmatprep.subr.mxu0 0.0
          %872 = vmatpush1.msra.mxu0 0.0
          %873 = vmatprep.subr.mxu0 0.0
          %874 = vmatpush1.msra.mxu0 0.0
          %875 = vmatprep.subr.mxu0 0.0
          %876 = vmatpush1.msra.mxu0 0.0
          %877 = vmatprep.subr.mxu0 0.0
          %878 = vmatpush1.msra.mxu0 0.0
          %879 = vmatprep.subr.mxu0 0.0
          %880 = vmatpush1.msra.mxu0 0.0
          %881 = vmatprep.subr.mxu0 0.0
          %882 = vmatpush1.msra.mxu0 0.0
          %883 = vmatprep.subr.mxu0 0.0
          %884 = vmatpush1.msra.mxu0 0.0
          %885 = vmatprep.subr.mxu0 0.0
          %886 = vmatpush1.msra.mxu0 0.0
          %887 = vmatprep.subr.mxu0 0.0
          %888 = vmatpush1.msra.mxu0 0.0
          %889 = vmatprep.subr.mxu0 0.0
          %890 = vmatpush1.msra.mxu0 0.0
          %891 = vmatprep.subr.mxu0 %v844
          %892 = vmatpush1.msra.mxu0 %v843
          %893 = vmatprep.subr.mxu0 %v842
          %894 = vmatpush1.msra.mxu0 %v841
          %895 = vmatprep.subr.mxu0 %v840
          %896 = vmatpush1.msra.mxu0 %v839
          %897 = vmatprep.subr.mxu0 %v838
          %898 = vmatpush1.msra.mxu0 %v837
          %899 = vmatprep.subr.mxu0 0.0
          %900 = vmatpush2.msra.mxu0 0.0
          %901 = vmatprep.subr.mxu0 0.0
          %902 = vmatpush2.msra.mxu0 0.0
          %903 = vmatprep.subr.mxu0 0.0
          %904 = vmatpush2.msra.mxu0 0.0
          %905 = vmatprep.subr.mxu0 0.0
          %906 = vmatpush2.msra.mxu0 0.0
          %907 = vmatprep.subr.mxu0 0.0
          %908 = vmatpush2.msra.mxu0 0.0
          %909 = vmatprep.subr.mxu0 0.0
          %910 = vmatpush2.msra.mxu0 0.0
          %911 = vmatprep.subr.mxu0 0.0
          %912 = vmatpush2.msra.mxu0 0.0
          %913 = vmatprep.subr.mxu0 0.0
          %914 = vmatpush2.msra.mxu0 0.0
          %915 = vmatprep.subr.mxu0 0.0
          %916 = vmatpush2.msra.mxu0 0.0
          %917 = vmatprep.subr.mxu0 0.0
          %918 = vmatpush2.msra.mxu0 0.0
          %919 = vmatprep.subr.mxu0 0.0
          %920 = vmatpush2.msra.mxu0 0.0
          %921 = vmatprep.subr.mxu0 0.0
          %922 = vmatpush2.msra.mxu0 0.0
          %923 = vmatprep.subr.mxu0 0.0
          %924 = vmatpush2.msra.mxu0 0.0
          %925 = vmatprep.subr.mxu0 0.0
          %926 = vmatpush2.msra.mxu0 0.0
          %927 = vmatprep.subr.mxu0 0.0
          %928 = vmatpush2.msra.mxu0 0.0
          %929 = vmatprep.subr.mxu0 0.0
          %930 = vmatpush2.msra.mxu0 0.0
          %931 = vmatprep.mubr.f32.mxu0 0.0
          %932 = vmatmul.mubr.f32.gmra.mxu0 %v863
          %v933 = vpop.f32.mrf.mxu0
          %v934 = vadd.f32 %v850, %v933
          %v935 = vpop.f32.mrf.mxu0
          %v936 = vadd.f32 %v854, %v935
          %937 = vmatprep.mubr.f32.mxu0 0.0
          %938 = vmatmul.mubr.f32.gmra.mxu0 %v865
          %v939 = vpop.f32.mrf.mxu0
          %v940 = vadd.f32 %v850, %v939
          %v941 = vpop.f32.mrf.mxu0
          %v942 = vadd.f32 %v854, %v941
          %943 = vdwg.mxu0
          %v944 = vld [vmem:[%s9] sm:$0x3]
          %vm945 = vcmp.gt.f32.partialorder %v944, 0.5
          %v946 = vxor.u32 %v934, 2147483648
          %v947 = vxor.u32 %v936, 2147483648
          %v948 = vxor.u32 %v940, 2147483648
          %v949 = vxor.u32 %v942, 2147483648
          %v950 = vmul.f32 %v946, 1.442695
          %v951 = vpow.pop %v950
          %v952 = vmul.f32 %v947, 1.442695
          %v953 = vpow.pop %v952
          %v954 = vmul.f32 %v948, 1.442695
          %v955 = vpow.pop %v954
          %v956 = vmul.f32 %v949, 1.442695
          %v957 = vpow.pop %v956
          %v958 = vadd.f32 %v951, 1.0
          %v959 = vadd.f32 %v953, 1.0
          %v960 = vadd.f32 %v955, 1.0
          %v961 = vadd.f32 %v957, 1.0
          %v962 = vrcp.pop %v958
          %v963 = vmul.f32 1.0, %v962
          %v964 = vrcp.pop %v959
          %v965 = vmul.f32 1.0, %v964
          %v966 = vrcp.pop %v960
          %v967 = vmul.f32 1.0, %v966
          %v968 = vrcp.pop %v961
          %v969 = vmul.f32 1.0, %v968
          %v970 = vmul.f32 %v934, %v963
          %v971 = vmul.f32 %v936, %v965
          %v972 = vmul.f32 %v940, %v967
          %v973 = vmul.f32 %v942, %v969
          %v974 = vsel %vm945, 1, 0
          %v975 = vlaneseq
          %v976 = vshrl.u32 %v975, 7
          %v977 = vsub.s32 0, %v976
          %v978 = vrot.slane %v974, %v977
          %v979 = vlaneseq
          %v980 = vshrl.u32 %v979, 7
          %v981 = vsub.s32 1, %v980
          %v982 = vrot.slane %v974, %v981
          %vm983 = vcmp.eq.s32.totalorder %v978, 1
          %vm984 = vcmp.eq.s32.totalorder %v982, 1
          %v985 = vsel %vm983, %v970, %v934
          %v986 = vsel %vm984, %v971, %v936
          %v987 = vsel %vm983, %v972, %v940
          %v988 = vsel %vm984, %v973, %v942
          %989 = vst.msk [vmem:[#allocation2] sm:$0xff] %vm582, %v985
          %990 = vst.msk [vmem:[#allocation2 + $0x8] sm:$0xff] %vm582, %v987
          %993 = vrot.lane.b32.xlu0 %v985, 96
          %v994 = vpop.permute.xlu0 %993
          %995 = vrot.lane.b32.xlu0 %v987, 96
          %v996 = vpop.permute.xlu0 %995
          %999 = vst.msk [vmem:[#allocation3] sm:$0xff] %vm582, %v994
          %1000 = vst.msk [vmem:[#allocation3 + $0x8] sm:$0xff] %vm582, %v996
          %1001 = vrot.lane.b32.xlu0 %v985, 64
          %v1002 = vpop.permute.xlu0 %1001
          %1003 = vrot.lane.b32.xlu0 %v987, 64
          %v1004 = vpop.permute.xlu0 %1003
          %1007 = vst.msk [vmem:[#allocation4] sm:$0xff] %vm582, %v1002
          %1008 = vst.msk [vmem:[#allocation4 + $0x8] sm:$0xff] %vm582, %v1004
          %1009 = vrot.lane.b32.xlu0 %v985, 32
          %v1010 = vpop.permute.xlu0 %1009
          %1011 = vrot.lane.b32.xlu0 %v987, 32
          %v1012 = vpop.permute.xlu0 %1011
          %1015 = vst.msk [vmem:[#allocation5] sm:$0xff] %vm582, %v1010
          %1016 = vst.msk [vmem:[#allocation5 + $0x8] sm:$0xff] %vm582, %v1012
          %1017 = vst.msk [vmem:[#allocation6] sm:$0xff] %vm582, %v986
          %1018 = vst.msk [vmem:[#allocation6 + $0x8] sm:$0xff] %vm582, %v988
          %1019 = vst.msk [vmem:[#allocation7] sm:$0xff] %vm582, 0.0
          %1020 = vst.msk [vmem:[#allocation7 + $0x8] sm:$0xff] %vm582, 0.0
        $region96: #{tpu_custom_call.1} parent=63 // pred_fallthru
          _
        %v1021 = vld [vmem:[%s501] sm:$0xff]
        %v1022 = vld [vmem:[%s501 + $0x8] sm:$0xff]
        %v1023 = vld [vmem:[%s501 + $0x10] sm:$0xff]
        %v1024 = vld [vmem:[%s501 + $0x18] sm:$0xff]
        %v1025 = vld [vmem:[%s501 + $0x20] sm:$0xff]
        %v1026 = vld [vmem:[%s501 + $0x28] sm:$0xff]
        %v1027 = vld [vmem:[%s501 + $0x30] sm:$0xff]
        %v1028 = vld [vmem:[%s501 + $0x38] sm:$0xff]
        %v1029 = vld [vmem:[%s501 + $0x40] sm:$0xff]
        %v1030 = vld [vmem:[%s501 + $0x48] sm:$0xff]
        %v1031 = vld [vmem:[%s501 + $0x50] sm:$0xff]
        %v1032 = vld [vmem:[%s501 + $0x58] sm:$0xff]
        %v1033 = vld [vmem:[%s501 + $0x60] sm:$0xff]
        %v1034 = vld [vmem:[%s501 + $0x68] sm:$0xff]
        %v1035 = vld [vmem:[%s501 + $0x70] sm:$0xff]
        %v1036 = vld [vmem:[%s501 + $0x78] sm:$0xff]
        %v1037 = vld [vmem:[%s501 + $0x80] sm:$0xff]
        %v1038 = vld [vmem:[%s501 + $0x88] sm:$0xff]
        %v1039 = vld [vmem:[%s501 + $0x90] sm:$0xff]
        %v1040 = vld [vmem:[%s501 + $0x98] sm:$0xff]
        %v1041 = vld [vmem:[%s501 + $0xa0] sm:$0xff]
        %v1042 = vld [vmem:[%s501 + $0xa8] sm:$0xff]
        %v1043 = vld [vmem:[%s501 + $0xb0] sm:$0xff]
        %v1044 = vld [vmem:[%s501 + $0xb8] sm:$0xff]
        %v1045 = vld [vmem:[%s501 + $0xc0] sm:$0xff]
        %v1046 = vld [vmem:[%s501 + $0xc8] sm:$0xff]
        %v1047 = vld [vmem:[%s501 + $0xd0] sm:$0xff]
        %v1048 = vld [vmem:[%s501 + $0xd8] sm:$0xff]
        %v1049 = vld [vmem:[%s501 + $0xe0] sm:$0xff]
        %v1050 = vld [vmem:[%s501 + $0xe8] sm:$0xff]
        %v1051 = vld [vmem:[%s501 + $0xf0] sm:$0xff]
        %v1052 = vld [vmem:[%s501 + $0xf8] sm:$0xff]
        %vm1053 = vcmask 261120
        %v1054 = vsel %vm1053, %v1021, 0.0
        %1055 = vadd.xlane.f32.xlu0 %v1054
        %v1056 = vpop.xlane.xlu0 %1055
        %v1057 = vsel %vm1053, %v1022, 0.0
        %1058 = vadd.xlane.f32.xlu0 %v1057
        %v1059 = vpop.xlane.xlu0 %1058
        %v1060 = vsel %vm1053, %v1023, 0.0
        %1061 = vadd.xlane.f32.xlu0 %v1060
        %v1062 = vpop.xlane.xlu0 %1061
        %v1063 = vsel %vm1053, %v1024, 0.0
        %1064 = vadd.xlane.f32.xlu0 %v1063
        %v1065 = vpop.xlane.xlu0 %1064
        %v1066 = vsel %vm1053, %v1025, 0.0
        %1067 = vadd.xlane.f32.xlu0 %v1066
        %v1068 = vpop.xlane.xlu0 %1067
        %v1069 = vsel %vm1053, %v1026, 0.0
        %1070 = vadd.xlane.f32.xlu0 %v1069
        %v1071 = vpop.xlane.xlu0 %1070
        %v1072 = vsel %vm1053, %v1027, 0.0
        %1073 = vadd.xlane.f32.xlu0 %v1072
        %v1074 = vpop.xlane.xlu0 %1073
        %v1075 = vsel %vm1053, %v1028, 0.0
        %1076 = vadd.xlane.f32.xlu0 %v1075
        %v1077 = vpop.xlane.xlu0 %1076
        %v1078 = vsel %vm1053, %v1029, 0.0
        %1079 = vadd.xlane.f32.xlu0 %v1078
        %v1080 = vpop.xlane.xlu0 %1079
        %v1081 = vsel %vm1053, %v1030, 0.0
        %1082 = vadd.xlane.f32.xlu0 %v1081
        %v1083 = vpop.xlane.xlu0 %1082
        %v1084 = vsel %vm1053, %v1031, 0.0
        %1085 = vadd.xlane.f32.xlu0 %v1084
        %v1086 = vpop.xlane.xlu0 %1085
        %v1087 = vsel %vm1053, %v1032, 0.0
        %1088 = vadd.xlane.f32.xlu0 %v1087
        %v1089 = vpop.xlane.xlu0 %1088
        %v1090 = vsel %vm1053, %v1033, 0.0
        %1091 = vadd.xlane.f32.xlu0 %v1090
        %v1092 = vpop.xlane.xlu0 %1091
        %v1093 = vsel %vm1053, %v1034, 0.0
        %1094 = vadd.xlane.f32.xlu0 %v1093
        %v1095 = vpop.xlane.xlu0 %1094
        %v1096 = vsel %vm1053, %v1035, 0.0
        %1097 = vadd.xlane.f32.xlu0 %v1096
        %v1098 = vpop.xlane.xlu0 %1097
        %v1099 = vsel %vm1053, %v1036, 0.0
        %1100 = vadd.xlane.f32.xlu0 %v1099
        %v1101 = vpop.xlane.xlu0 %1100
        %v1102 = vsel %vm1053, %v1037, 0.0
        %1103 = vadd.xlane.f32.xlu0 %v1102
        %v1104 = vpop.xlane.xlu0 %1103
        %v1105 = vsel %vm1053, %v1038, 0.0
        %1106 = vadd.xlane.f32.xlu0 %v1105
        %v1107 = vpop.xlane.xlu0 %1106
        %v1108 = vsel %vm1053, %v1039, 0.0
        %1109 = vadd.xlane.f32.xlu0 %v1108
        %v1110 = vpop.xlane.xlu0 %1109
        %v1111 = vsel %vm1053, %v1040, 0.0
        %1112 = vadd.xlane.f32.xlu0 %v1111
        %v1113 = vpop.xlane.xlu0 %1112
        %v1114 = vsel %vm1053, %v1041, 0.0
        %1115 = vadd.xlane.f32.xlu0 %v1114
        %v1116 = vpop.xlane.xlu0 %1115
        %v1117 = vsel %vm1053, %v1042, 0.0
        %1118 = vadd.xlane.f32.xlu0 %v1117
        %v1119 = vpop.xlane.xlu0 %1118
        %v1120 = vsel %vm1053, %v1043, 0.0
        %1121 = vadd.xlane.f32.xlu0 %v1120
        %v1122 = vpop.xlane.xlu0 %1121
        %v1123 = vsel %vm1053, %v1044, 0.0
        %1124 = vadd.xlane.f32.xlu0 %v1123
        %v1125 = vpop.xlane.xlu0 %1124
        %v1126 = vsel %vm1053, %v1045, 0.0
        %1127 = vadd.xlane.f32.xlu0 %v1126
        %v1128 = vpop.xlane.xlu0 %1127
        %v1129 = vsel %vm1053, %v1046, 0.0
        %1130 = vadd.xlane.f32.xlu0 %v1129
        %v1131 = vpop.xlane.xlu0 %1130
        %v1132 = vsel %vm1053, %v1047, 0.0
        %1133 = vadd.xlane.f32.xlu0 %v1132
        %v1134 = vpop.xlane.xlu0 %1133
        %v1135 = vsel %vm1053, %v1048, 0.0
        %1136 = vadd.xlane.f32.xlu0 %v1135
        %v1137 = vpop.xlane.xlu0 %1136
        %v1138 = vsel %vm1053, %v1049, 0.0
        %1139 = vadd.xlane.f32.xlu0 %v1138
        %v1140 = vpop.xlane.xlu0 %1139
        %v1141 = vsel %vm1053, %v1050, 0.0
        %1142 = vadd.xlane.f32.xlu0 %v1141
        %v1143 = vpop.xlane.xlu0 %1142
        %v1144 = vsel %vm1053, %v1051, 0.0
        %1145 = vadd.xlane.f32.xlu0 %v1144
        %v1146 = vpop.xlane.xlu0 %1145
        %v1147 = vsel %vm1053, %v1052, 0.0
        %1148 = vadd.xlane.f32.xlu0 %v1147
        %v1149 = vpop.xlane.xlu0 %1148
        %v1150 = vrcp.pop 32.0
        %v1151 = vmul.f32 %v1056, %v1150
        %v1152 = vmul.f32 %v1059, %v1150
        %v1153 = vmul.f32 %v1062, %v1150
        %v1154 = vmul.f32 %v1065, %v1150
        %v1155 = vmul.f32 %v1068, %v1150
        %v1156 = vmul.f32 %v1071, %v1150
        %v1157 = vmul.f32 %v1074, %v1150
        %v1158 = vmul.f32 %v1077, %v1150
        %v1159 = vmul.f32 %v1080, %v1150
        %v1160 = vmul.f32 %v1083, %v1150
        %v1161 = vmul.f32 %v1086, %v1150
        %v1162 = vmul.f32 %v1089, %v1150
        %v1163 = vmul.f32 %v1092, %v1150
        %v1164 = vmul.f32 %v1095, %v1150
        %v1165 = vmul.f32 %v1098, %v1150
        %v1166 = vmul.f32 %v1101, %v1150
        %v1167 = vmul.f32 %v1104, %v1150
        %v1168 = vmul.f32 %v1107, %v1150
        %v1169 = vmul.f32 %v1110, %v1150
        %v1170 = vmul.f32 %v1113, %v1150
        %v1171 = vmul.f32 %v1116, %v1150
        %v1172 = vmul.f32 %v1119, %v1150
        %v1173 = vmul.f32 %v1122, %v1150
        %v1174 = vmul.f32 %v1125, %v1150
        %v1175 = vmul.f32 %v1128, %v1150
        %v1176 = vmul.f32 %v1131, %v1150
        %v1177 = vmul.f32 %v1134, %v1150
        %v1178 = vmul.f32 %v1137, %v1150
        %v1179 = vmul.f32 %v1140, %v1150
        %v1180 = vmul.f32 %v1143, %v1150
        %v1181 = vmul.f32 %v1146, %v1150
        %v1182 = vmul.f32 %v1149, %v1150
        %v1183 = vsub.f32 %v1021, %v1151
        %v1184 = vsub.f32 %v1022, %v1152
        %v1185 = vsub.f32 %v1023, %v1153
        %v1186 = vsub.f32 %v1024, %v1154
        %v1187 = vsub.f32 %v1025, %v1155
        %v1188 = vsub.f32 %v1026, %v1156
        %v1189 = vsub.f32 %v1027, %v1157
        %v1190 = vsub.f32 %v1028, %v1158
        %v1191 = vsub.f32 %v1029, %v1159
        %v1192 = vsub.f32 %v1030, %v1160
        %v1193 = vsub.f32 %v1031, %v1161
        %v1194 = vsub.f32 %v1032, %v1162
        %v1195 = vsub.f32 %v1033, %v1163
        %v1196 = vsub.f32 %v1034, %v1164
        %v1197 = vsub.f32 %v1035, %v1165
        %v1198 = vsub.f32 %v1036, %v1166
        %v1199 = vsub.f32 %v1037, %v1167
        %v1200 = vsub.f32 %v1038, %v1168
        %v1201 = vsub.f32 %v1039, %v1169
        %v1202 = vsub.f32 %v1040, %v1170
        %v1203 = vsub.f32 %v1041, %v1171
        %v1204 = vsub.f32 %v1042, %v1172
        %v1205 = vsub.f32 %v1043, %v1173
        %v1206 = vsub.f32 %v1044, %v1174
        %v1207 = vsub.f32 %v1045, %v1175
        %v1208 = vsub.f32 %v1046, %v1176
        %v1209 = vsub.f32 %v1047, %v1177
        %v1210 = vsub.f32 %v1048, %v1178
        %v1211 = vsub.f32 %v1049, %v1179
        %v1212 = vsub.f32 %v1050, %v1180
        %v1213 = vsub.f32 %v1051, %v1181
        %v1214 = vsub.f32 %v1052, %v1182
        %v1215 = vmul.f32 %v1183, %v1183
        %v1216 = vmul.f32 %v1184, %v1184
        %v1217 = vmul.f32 %v1185, %v1185
        %v1218 = vmul.f32 %v1186, %v1186
        %v1219 = vmul.f32 %v1187, %v1187
        %v1220 = vmul.f32 %v1188, %v1188
        %v1221 = vmul.f32 %v1189, %v1189
        %v1222 = vmul.f32 %v1190, %v1190
        %v1223 = vmul.f32 %v1191, %v1191
        %v1224 = vmul.f32 %v1192, %v1192
        %v1225 = vmul.f32 %v1193, %v1193
        %v1226 = vmul.f32 %v1194, %v1194
        %v1227 = vmul.f32 %v1195, %v1195
        %v1228 = vmul.f32 %v1196, %v1196
        %v1229 = vmul.f32 %v1197, %v1197
        %v1230 = vmul.f32 %v1198, %v1198
        %v1231 = vmul.f32 %v1199, %v1199
        %v1232 = vmul.f32 %v1200, %v1200
        %v1233 = vmul.f32 %v1201, %v1201
        %v1234 = vmul.f32 %v1202, %v1202
        %v1235 = vmul.f32 %v1203, %v1203
        %v1236 = vmul.f32 %v1204, %v1204
        %v1237 = vmul.f32 %v1205, %v1205
        %v1238 = vmul.f32 %v1206, %v1206
        %v1239 = vmul.f32 %v1207, %v1207
        %v1240 = vmul.f32 %v1208, %v1208
        %v1241 = vmul.f32 %v1209, %v1209
        %v1242 = vmul.f32 %v1210, %v1210
        %v1243 = vmul.f32 %v1211, %v1211
        %v1244 = vmul.f32 %v1212, %v1212
        %v1245 = vmul.f32 %v1213, %v1213
        %v1246 = vmul.f32 %v1214, %v1214
        %v1247 = vsel %vm1053, %v1215, 0.0
        %1248 = vadd.xlane.f32.xlu0 %v1247
        %v1249 = vpop.xlane.xlu0 %1248
        %v1250 = vsel %vm1053, %v1216, 0.0
        %1251 = vadd.xlane.f32.xlu0 %v1250
        %v1252 = vpop.xlane.xlu0 %1251
        %v1253 = vsel %vm1053, %v1217, 0.0
        %1254 = vadd.xlane.f32.xlu0 %v1253
        %v1255 = vpop.xlane.xlu0 %1254
        %v1256 = vsel %vm1053, %v1218, 0.0
        %1257 = vadd.xlane.f32.xlu0 %v1256
        %v1258 = vpop.xlane.xlu0 %1257
        %v1259 = vsel %vm1053, %v1219, 0.0
        %1260 = vadd.xlane.f32.xlu0 %v1259
        %v1261 = vpop.xlane.xlu0 %1260
        %v1262 = vsel %vm1053, %v1220, 0.0
        %1263 = vadd.xlane.f32.xlu0 %v1262
        %v1264 = vpop.xlane.xlu0 %1263
        %v1265 = vsel %vm1053, %v1221, 0.0
        %1266 = vadd.xlane.f32.xlu0 %v1265
        %v1267 = vpop.xlane.xlu0 %1266
        %v1268 = vsel %vm1053, %v1222, 0.0
        %1269 = vadd.xlane.f32.xlu0 %v1268
        %v1270 = vpop.xlane.xlu0 %1269
        %v1271 = vsel %vm1053, %v1223, 0.0
        %1272 = vadd.xlane.f32.xlu0 %v1271
        %v1273 = vpop.xlane.xlu0 %1272
        %v1274 = vsel %vm1053, %v1224, 0.0
        %1275 = vadd.xlane.f32.xlu0 %v1274
        %v1276 = vpop.xlane.xlu0 %1275
        %v1277 = vsel %vm1053, %v1225, 0.0
        %1278 = vadd.xlane.f32.xlu0 %v1277
        %v1279 = vpop.xlane.xlu0 %1278
        %v1280 = vsel %vm1053, %v1226, 0.0
        %1281 = vadd.xlane.f32.xlu0 %v1280
        %v1282 = vpop.xlane.xlu0 %1281
        %v1283 = vsel %vm1053, %v1227, 0.0
        %1284 = vadd.xlane.f32.xlu0 %v1283
        %v1285 = vpop.xlane.xlu0 %1284
        %v1286 = vsel %vm1053, %v1228, 0.0
        %1287 = vadd.xlane.f32.xlu0 %v1286
        %v1288 = vpop.xlane.xlu0 %1287
        %v1289 = vsel %vm1053, %v1229, 0.0
        %1290 = vadd.xlane.f32.xlu0 %v1289
        %v1291 = vpop.xlane.xlu0 %1290
        %v1292 = vsel %vm1053, %v1230, 0.0
        %1293 = vadd.xlane.f32.xlu0 %v1292
        %v1294 = vpop.xlane.xlu0 %1293
        %v1295 = vsel %vm1053, %v1231, 0.0
        %1296 = vadd.xlane.f32.xlu0 %v1295
        %v1297 = vpop.xlane.xlu0 %1296
        %v1298 = vsel %vm1053, %v1232, 0.0
        %1299 = vadd.xlane.f32.xlu0 %v1298
        %v1300 = vpop.xlane.xlu0 %1299
        %v1301 = vsel %vm1053, %v1233, 0.0
        %1302 = vadd.xlane.f32.xlu0 %v1301
        %v1303 = vpop.xlane.xlu0 %1302
        %v1304 = vsel %vm1053, %v1234, 0.0
        %1305 = vadd.xlane.f32.xlu0 %v1304
        %v1306 = vpop.xlane.xlu0 %1305
        %v1307 = vsel %vm1053, %v1235, 0.0
        %1308 = vadd.xlane.f32.xlu0 %v1307
        %v1309 = vpop.xlane.xlu0 %1308
        %v1310 = vsel %vm1053, %v1236, 0.0
        %1311 = vadd.xlane.f32.xlu0 %v1310
        %v1312 = vpop.xlane.xlu0 %1311
        %v1313 = vsel %vm1053, %v1237, 0.0
        %1314 = vadd.xlane.f32.xlu0 %v1313
        %v1315 = vpop.xlane.xlu0 %1314
        %v1316 = vsel %vm1053, %v1238, 0.0
        %1317 = vadd.xlane.f32.xlu0 %v1316
        %v1318 = vpop.xlane.xlu0 %1317
        %v1319 = vsel %vm1053, %v1239, 0.0
        %1320 = vadd.xlane.f32.xlu0 %v1319
        %v1321 = vpop.xlane.xlu0 %1320
        %v1322 = vsel %vm1053, %v1240, 0.0
        %1323 = vadd.xlane.f32.xlu0 %v1322
        %v1324 = vpop.xlane.xlu0 %1323
        %v1325 = vsel %vm1053, %v1241, 0.0
        %1326 = vadd.xlane.f32.xlu0 %v1325
        %v1327 = vpop.xlane.xlu0 %1326
        %v1328 = vsel %vm1053, %v1242, 0.0
        %1329 = vadd.xlane.f32.xlu0 %v1328
        %v1330 = vpop.xlane.xlu0 %1329
        %v1331 = vsel %vm1053, %v1243, 0.0
        %1332 = vadd.xlane.f32.xlu0 %v1331
        %v1333 = vpop.xlane.xlu0 %1332
        %v1334 = vsel %vm1053, %v1244, 0.0
        %1335 = vadd.xlane.f32.xlu0 %v1334
        %v1336 = vpop.xlane.xlu0 %1335
        %v1337 = vsel %vm1053, %v1245, 0.0
        %1338 = vadd.xlane.f32.xlu0 %v1337
        %v1339 = vpop.xlane.xlu0 %1338
        %v1340 = vsel %vm1053, %v1246, 0.0
        %1341 = vadd.xlane.f32.xlu0 %v1340
        %v1342 = vpop.xlane.xlu0 %1341
        %v1343 = vmul.f32 %v1249, %v1150
        %v1344 = vmul.f32 %v1252, %v1150
        %v1345 = vmul.f32 %v1255, %v1150
        %v1346 = vmul.f32 %v1258, %v1150
        %v1347 = vmul.f32 %v1261, %v1150
        %v1348 = vmul.f32 %v1264, %v1150
        %v1349 = vmul.f32 %v1267, %v1150
        %v1350 = vmul.f32 %v1270, %v1150
        %v1351 = vmul.f32 %v1273, %v1150
        %v1352 = vmul.f32 %v1276, %v1150
        %v1353 = vmul.f32 %v1279, %v1150
        %v1354 = vmul.f32 %v1282, %v1150
        %v1355 = vmul.f32 %v1285, %v1150
        %v1356 = vmul.f32 %v1288, %v1150
        %v1357 = vmul.f32 %v1291, %v1150
        %v1358 = vmul.f32 %v1294, %v1150
        %v1359 = vmul.f32 %v1297, %v1150
        %v1360 = vmul.f32 %v1300, %v1150
        %v1361 = vmul.f32 %v1303, %v1150
        %v1362 = vmul.f32 %v1306, %v1150
        %v1363 = vmul.f32 %v1309, %v1150
        %v1364 = vmul.f32 %v1312, %v1150
        %v1365 = vmul.f32 %v1315, %v1150
        %v1366 = vmul.f32 %v1318, %v1150
        %v1367 = vmul.f32 %v1321, %v1150
        %v1368 = vmul.f32 %v1324, %v1150
        %v1369 = vmul.f32 %v1327, %v1150
        %v1370 = vmul.f32 %v1330, %v1150
        %v1371 = vmul.f32 %v1333, %v1150
        %v1372 = vmul.f32 %v1336, %v1150
        %v1373 = vmul.f32 %v1339, %v1150
        %v1374 = vmul.f32 %v1342, %v1150
        %v1375 = vadd.f32 %v1343, 1e-05
        %v1376 = vadd.f32 %v1344, 1e-05
        %v1377 = vadd.f32 %v1345, 1e-05
        %v1378 = vadd.f32 %v1346, 1e-05
        %v1379 = vadd.f32 %v1347, 1e-05
        %v1380 = vadd.f32 %v1348, 1e-05
        %v1381 = vadd.f32 %v1349, 1e-05
        %v1382 = vadd.f32 %v1350, 1e-05
        %v1383 = vadd.f32 %v1351, 1e-05
        %v1384 = vadd.f32 %v1352, 1e-05
        %v1385 = vadd.f32 %v1353, 1e-05
        %v1386 = vadd.f32 %v1354, 1e-05
        %v1387 = vadd.f32 %v1355, 1e-05
        %v1388 = vadd.f32 %v1356, 1e-05
        %v1389 = vadd.f32 %v1357, 1e-05
        %v1390 = vadd.f32 %v1358, 1e-05
        %v1391 = vadd.f32 %v1359, 1e-05
        %v1392 = vadd.f32 %v1360, 1e-05
        %v1393 = vadd.f32 %v1361, 1e-05
        %v1394 = vadd.f32 %v1362, 1e-05
        %v1395 = vadd.f32 %v1363, 1e-05
        %v1396 = vadd.f32 %v1364, 1e-05
        %v1397 = vadd.f32 %v1365, 1e-05
        %v1398 = vadd.f32 %v1366, 1e-05
        %v1399 = vadd.f32 %v1367, 1e-05
        %v1400 = vadd.f32 %v1368, 1e-05
        %v1401 = vadd.f32 %v1369, 1e-05
        %v1402 = vadd.f32 %v1370, 1e-05
        %v1403 = vadd.f32 %v1371, 1e-05
        %v1404 = vadd.f32 %v1372, 1e-05
        %v1405 = vadd.f32 %v1373, 1e-05
        %v1406 = vadd.f32 %v1374, 1e-05
        %v1407 = vrsqrt.pop %v1375
        %v1408 = vrsqrt.pop %v1376
        %v1409 = vrsqrt.pop %v1377
        %v1410 = vrsqrt.pop %v1378
        %v1411 = vrsqrt.pop %v1379
        %v1412 = vrsqrt.pop %v1380
        %v1413 = vrsqrt.pop %v1381
        %v1414 = vrsqrt.pop %v1382
        %v1415 = vrsqrt.pop %v1383
        %v1416 = vrsqrt.pop %v1384
        %v1417 = vrsqrt.pop %v1385
        %v1418 = vrsqrt.pop %v1386
        %v1419 = vrsqrt.pop %v1387
        %v1420 = vrsqrt.pop %v1388
        %v1421 = vrsqrt.pop %v1389
        %v1422 = vrsqrt.pop %v1390
        %v1423 = vrsqrt.pop %v1391
        %v1424 = vrsqrt.pop %v1392
        %v1425 = vrsqrt.pop %v1393
        %v1426 = vrsqrt.pop %v1394
        %v1427 = vrsqrt.pop %v1395
        %v1428 = vrsqrt.pop %v1396
        %v1429 = vrsqrt.pop %v1397
        %v1430 = vrsqrt.pop %v1398
        %v1431 = vrsqrt.pop %v1399
        %v1432 = vrsqrt.pop %v1400
        %v1433 = vrsqrt.pop %v1401
        %v1434 = vrsqrt.pop %v1402
        %v1435 = vrsqrt.pop %v1403
        %v1436 = vrsqrt.pop %v1404
        %v1437 = vrsqrt.pop %v1405
        %v1438 = vrsqrt.pop %v1406
        %v1439 = vmul.f32 %v1183, %v1407
        %v1440 = vmul.f32 %v1184, %v1408
        %v1441 = vmul.f32 %v1185, %v1409
        %v1442 = vmul.f32 %v1186, %v1410
        %v1443 = vmul.f32 %v1187, %v1411
        %v1444 = vmul.f32 %v1188, %v1412
        %v1445 = vmul.f32 %v1189, %v1413
        %v1446 = vmul.f32 %v1190, %v1414
        %v1447 = vmul.f32 %v1191, %v1415
        %v1448 = vmul.f32 %v1192, %v1416
        %v1449 = vmul.f32 %v1193, %v1417
        %v1450 = vmul.f32 %v1194, %v1418
        %v1451 = vmul.f32 %v1195, %v1419
        %v1452 = vmul.f32 %v1196, %v1420
        %v1453 = vmul.f32 %v1197, %v1421
        %v1454 = vmul.f32 %v1198, %v1422
        %v1455 = vmul.f32 %v1199, %v1423
        %v1456 = vmul.f32 %v1200, %v1424
        %v1457 = vmul.f32 %v1201, %v1425
        %v1458 = vmul.f32 %v1202, %v1426
        %v1459 = vmul.f32 %v1203, %v1427
        %v1460 = vmul.f32 %v1204, %v1428
        %v1461 = vmul.f32 %v1205, %v1429
        %v1462 = vmul.f32 %v1206, %v1430
        %v1463 = vmul.f32 %v1207, %v1431
        %v1464 = vmul.f32 %v1208, %v1432
        %v1465 = vmul.f32 %v1209, %v1433
        %v1466 = vmul.f32 %v1210, %v1434
        %v1467 = vmul.f32 %v1211, %v1435
        %v1468 = vmul.f32 %v1212, %v1436
        %v1469 = vmul.f32 %v1213, %v1437
        %v1470 = vmul.f32 %v1214, %v1438
        %v1472 = vlaneseq
        %v1473 = vshrl.u32 %v1472, 7
        %v1474 = vsub.s32 0, %v1473
        %v1475 = vrot.slane %v574, %v1474
        %v1477 = vmul.f32 %v1439, %v1475
        %v1478 = vmul.f32 %v1440, %v1475
        %v1479 = vmul.f32 %v1441, %v1475
        %v1480 = vmul.f32 %v1442, %v1475
        %v1481 = vmul.f32 %v1443, %v1475
        %v1482 = vmul.f32 %v1444, %v1475
        %v1483 = vmul.f32 %v1445, %v1475
        %v1484 = vmul.f32 %v1446, %v1475
        %v1485 = vmul.f32 %v1447, %v1475
        %v1486 = vmul.f32 %v1448, %v1475
        %v1487 = vmul.f32 %v1449, %v1475
        %v1488 = vmul.f32 %v1450, %v1475
        %v1489 = vmul.f32 %v1451, %v1475
        %v1490 = vmul.f32 %v1452, %v1475
        %v1491 = vmul.f32 %v1453, %v1475
        %v1492 = vmul.f32 %v1454, %v1475
        %v1493 = vmul.f32 %v1455, %v1475
        %v1494 = vmul.f32 %v1456, %v1475
        %v1495 = vmul.f32 %v1457, %v1475
        %v1496 = vmul.f32 %v1458, %v1475
        %v1497 = vmul.f32 %v1459, %v1475
        %v1498 = vmul.f32 %v1460, %v1475
        %v1499 = vmul.f32 %v1461, %v1475
        %v1500 = vmul.f32 %v1462, %v1475
        %v1501 = vmul.f32 %v1463, %v1475
        %v1502 = vmul.f32 %v1464, %v1475
        %v1503 = vmul.f32 %v1465, %v1475
        %v1504 = vmul.f32 %v1466, %v1475
        %v1505 = vmul.f32 %v1467, %v1475
        %v1506 = vmul.f32 %v1468, %v1475
        %v1507 = vmul.f32 %v1469, %v1475
        %v1508 = vmul.f32 %v1470, %v1475
        %v1510 = vlaneseq
        %v1511 = vshrl.u32 %v1510, 7
        %v1512 = vsub.s32 0, %v1511
        %v1513 = vrot.slane %v575, %v1512
        %v1515 = vadd.f32 %v1477, %v1513
        %v1516 = vadd.f32 %v1478, %v1513
        %v1517 = vadd.f32 %v1479, %v1513
        %v1518 = vadd.f32 %v1480, %v1513
        %v1519 = vadd.f32 %v1481, %v1513
        %v1520 = vadd.f32 %v1482, %v1513
        %v1521 = vadd.f32 %v1483, %v1513
        %v1522 = vadd.f32 %v1484, %v1513
        %v1523 = vadd.f32 %v1485, %v1513
        %v1524 = vadd.f32 %v1486, %v1513
        %v1525 = vadd.f32 %v1487, %v1513
        %v1526 = vadd.f32 %v1488, %v1513
        %v1527 = vadd.f32 %v1489, %v1513
        %v1528 = vadd.f32 %v1490, %v1513
        %v1529 = vadd.f32 %v1491, %v1513
        %v1530 = vadd.f32 %v1492, %v1513
        %v1531 = vadd.f32 %v1493, %v1513
        %v1532 = vadd.f32 %v1494, %v1513
        %v1533 = vadd.f32 %v1495, %v1513
        %v1534 = vadd.f32 %v1496, %v1513
        %v1535 = vadd.f32 %v1497, %v1513
        %v1536 = vadd.f32 %v1498, %v1513
        %v1537 = vadd.f32 %v1499, %v1513
        %v1538 = vadd.f32 %v1500, %v1513
        %v1539 = vadd.f32 %v1501, %v1513
        %v1540 = vadd.f32 %v1502, %v1513
        %v1541 = vadd.f32 %v1503, %v1513
        %v1542 = vadd.f32 %v1504, %v1513
        %v1543 = vadd.f32 %v1505, %v1513
        %v1544 = vadd.f32 %v1506, %v1513
        %v1545 = vadd.f32 %v1507, %v1513
        %v1546 = vadd.f32 %v1508, %v1513
        %v1547 = vld [vmem:[#allocation19] sm:$0xff]
        %v1548 = vld [vmem:[#allocation19 + $0x8] sm:$0xff]
        %v1549 = vld [vmem:[#allocation19 + $0x10] sm:$0xff]
        %v1550 = vld [vmem:[#allocation19 + $0x18] sm:$0xff]
        %v1552 = vsel %vm1053, %v1515, 0
        %v1555 = vsel %vm1053, %v1516, 0
        %v1558 = vsel %vm1053, %v1517, 0
        %v1561 = vsel %vm1053, %v1518, 0
        %v1564 = vsel %vm1053, %v1519, 0
        %v1567 = vsel %vm1053, %v1520, 0
        %v1570 = vsel %vm1053, %v1521, 0
        %v1573 = vsel %vm1053, %v1522, 0
        %v1576 = vsel %vm1053, %v1523, 0
        %v1579 = vsel %vm1053, %v1524, 0
        %v1582 = vsel %vm1053, %v1525, 0
        %v1585 = vsel %vm1053, %v1526, 0
        %v1588 = vsel %vm1053, %v1527, 0
        %v1591 = vsel %vm1053, %v1528, 0
        %v1594 = vsel %vm1053, %v1529, 0
        %v1597 = vsel %vm1053, %v1530, 0
        %v1600 = vsel %vm1053, %v1531, 0
        %v1603 = vsel %vm1053, %v1532, 0
        %v1606 = vsel %vm1053, %v1533, 0
        %v1609 = vsel %vm1053, %v1534, 0
        %v1612 = vsel %vm1053, %v1535, 0
        %v1615 = vsel %vm1053, %v1536, 0
        %v1618 = vsel %vm1053, %v1537, 0
        %v1621 = vsel %vm1053, %v1538, 0
        %v1624 = vsel %vm1053, %v1539, 0
        %v1627 = vsel %vm1053, %v1540, 0
        %v1630 = vsel %vm1053, %v1541, 0
        %v1633 = vsel %vm1053, %v1542, 0
        %v1636 = vsel %vm1053, %v1543, 0
        %v1639 = vsel %vm1053, %v1544, 0
        %v1642 = vsel %vm1053, %v1545, 0
        %v1645 = vsel %vm1053, %v1546, 0
        %1647 = vmatprep.subr.mxu0 0.0
        %1648 = vmatpush1.msra.mxu0 0.0
        %1649 = vmatprep.subr.mxu0 0.0
        %1650 = vmatpush1.msra.mxu0 0.0
        %1651 = vmatprep.subr.mxu0 0.0
        %1652 = vmatpush1.msra.mxu0 0.0
        %1653 = vmatprep.subr.mxu0 0.0
        %1654 = vmatpush1.msra.mxu0 0.0
        %1655 = vmatprep.subr.mxu0 0.0
        %1656 = vmatpush1.msra.mxu0 0.0
        %1657 = vmatprep.subr.mxu0 0.0
        %1658 = vmatpush1.msra.mxu0 0.0
        %1659 = vmatprep.subr.mxu0 0.0
        %1660 = vmatpush1.msra.mxu0 0.0
        %1661 = vmatprep.subr.mxu0 0.0
        %1662 = vmatpush1.msra.mxu0 0.0
        %1663 = vmatprep.subr.mxu0 0.0
        %1664 = vmatpush1.msra.mxu0 0.0
        %1665 = vmatprep.subr.mxu0 0.0
        %1666 = vmatpush1.msra.mxu0 0.0
        %1667 = vmatprep.subr.mxu0 0.0
        %1668 = vmatpush1.msra.mxu0 0.0
        %1669 = vmatprep.subr.mxu0 0.0
        %1670 = vmatpush1.msra.mxu0 0.0
        %1671 = vmatprep.subr.mxu0 0.0
        %1672 = vmatpush1.msra.mxu0 %v1550
        %1673 = vmatprep.subr.mxu0 0.0
        %1674 = vmatpush1.msra.mxu0 %v1549
        %1675 = vmatprep.subr.mxu0 0.0
        %1676 = vmatpush1.msra.mxu0 %v1548
        %1677 = vmatprep.subr.mxu0 0.0
        %1678 = vmatpush1.msra.mxu0 %v1547
        %1679 = vmatprep.subr.mxu0 0.0
        %1680 = vmatpush2.msra.mxu0 0.0
        %1681 = vmatprep.subr.mxu0 0.0
        %1682 = vmatpush2.msra.mxu0 0.0
        %1683 = vmatprep.subr.mxu0 0.0
        %1684 = vmatpush2.msra.mxu0 0.0
        %1685 = vmatprep.subr.mxu0 0.0
        %1686 = vmatpush2.msra.mxu0 0.0
        %1687 = vmatprep.subr.mxu0 0.0
        %1688 = vmatpush2.msra.mxu0 0.0
        %1689 = vmatprep.subr.mxu0 0.0
        %1690 = vmatpush2.msra.mxu0 0.0
        %1691 = vmatprep.subr.mxu0 0.0
        %1692 = vmatpush2.msra.mxu0 0.0
        %1693 = vmatprep.subr.mxu0 0.0
        %1694 = vmatpush2.msra.mxu0 0.0
        %1695 = vmatprep.subr.mxu0 0.0
        %1696 = vmatpush2.msra.mxu0 0.0
        %1697 = vmatprep.subr.mxu0 0.0
        %1698 = vmatpush2.msra.mxu0 0.0
        %1699 = vmatprep.subr.mxu0 0.0
        %1700 = vmatpush2.msra.mxu0 0.0
        %1701 = vmatprep.subr.mxu0 0.0
        %1702 = vmatpush2.msra.mxu0 0.0
        %1703 = vmatprep.subr.mxu0 0.0
        %1704 = vmatpush2.msra.mxu0 0.0
        %1705 = vmatprep.subr.mxu0 0.0
        %1706 = vmatpush2.msra.mxu0 0.0
        %1707 = vmatprep.subr.mxu0 0.0
        %1708 = vmatpush2.msra.mxu0 0.0
        %1709 = vmatprep.subr.mxu0 0.0
        %1710 = vmatpush2.msra.mxu0 0.0
        %1711 = vmatprep.mubr.f32.mxu0 0.0
        %1712 = vmatmul.mubr.f32.gmra.mxu0 %v1552
        %v1713 = vpop.f32.mrf.mxu0
        %v1714 = vadd.f32 0.0, %v1713
        %v1715 = vpop.f32.mrf.mxu0
        %1716 = vmatprep.mubr.f32.mxu0 0.0
        %1717 = vmatmul.mubr.f32.gmra.mxu0 %v1555
        %v1718 = vpop.f32.mrf.mxu0
        %v1719 = vadd.f32 0.0, %v1718
        %v1720 = vpop.f32.mrf.mxu0
        %1721 = vmatprep.mubr.f32.mxu0 0.0
        %1722 = vmatmul.mubr.f32.gmra.mxu0 %v1558
        %v1723 = vpop.f32.mrf.mxu0
        %v1724 = vadd.f32 0.0, %v1723
        %v1725 = vpop.f32.mrf.mxu0
        %1726 = vmatprep.mubr.f32.mxu0 0.0
        %1727 = vmatmul.mubr.f32.gmra.mxu0 %v1561
        %v1728 = vpop.f32.mrf.mxu0
        %v1729 = vadd.f32 0.0, %v1728
        %v1730 = vpop.f32.mrf.mxu0
        %1731 = vmatprep.mubr.f32.mxu0 0.0
        %1732 = vmatmul.mubr.f32.gmra.mxu0 %v1564
        %v1733 = vpop.f32.mrf.mxu0
        %v1734 = vadd.f32 0.0, %v1733
        %v1735 = vpop.f32.mrf.mxu0
        %1736 = vmatprep.mubr.f32.mxu0 0.0
        %1737 = vmatmul.mubr.f32.gmra.mxu0 %v1567
        %v1738 = vpop.f32.mrf.mxu0
        %v1739 = vadd.f32 0.0, %v1738
        %v1740 = vpop.f32.mrf.mxu0
        %1741 = vmatprep.mubr.f32.mxu0 0.0
        %1742 = vmatmul.mubr.f32.gmra.mxu0 %v1570
        %v1743 = vpop.f32.mrf.mxu0
        %v1744 = vadd.f32 0.0, %v1743
        %v1745 = vpop.f32.mrf.mxu0
        %1746 = vmatprep.mubr.f32.mxu0 0.0
        %1747 = vmatmul.mubr.f32.gmra.mxu0 %v1573
        %v1748 = vpop.f32.mrf.mxu0
        %v1749 = vadd.f32 0.0, %v1748
        %v1750 = vpop.f32.mrf.mxu0
        %1751 = vmatprep.mubr.f32.mxu0 0.0
        %1752 = vmatmul.mubr.f32.gmra.mxu0 %v1576
        %v1753 = vpop.f32.mrf.mxu0
        %v1754 = vadd.f32 0.0, %v1753
        %v1755 = vpop.f32.mrf.mxu0
        %1756 = vmatprep.mubr.f32.mxu0 0.0
        %1757 = vmatmul.mubr.f32.gmra.mxu0 %v1579
        %v1758 = vpop.f32.mrf.mxu0
        %v1759 = vadd.f32 0.0, %v1758
        %v1760 = vpop.f32.mrf.mxu0
        %1761 = vmatprep.mubr.f32.mxu0 0.0
        %1762 = vmatmul.mubr.f32.gmra.mxu0 %v1582
        %v1763 = vpop.f32.mrf.mxu0
        %v1764 = vadd.f32 0.0, %v1763
        %v1765 = vpop.f32.mrf.mxu0
        %1766 = vmatprep.mubr.f32.mxu0 0.0
        %1767 = vmatmul.mubr.f32.gmra.mxu0 %v1585
        %v1768 = vpop.f32.mrf.mxu0
        %v1769 = vadd.f32 0.0, %v1768
        %v1770 = vpop.f32.mrf.mxu0
        %1771 = vmatprep.mubr.f32.mxu0 0.0
        %1772 = vmatmul.mubr.f32.gmra.mxu0 %v1588
        %v1773 = vpop.f32.mrf.mxu0
        %v1774 = vadd.f32 0.0, %v1773
        %v1775 = vpop.f32.mrf.mxu0
        %1776 = vmatprep.mubr.f32.mxu0 0.0
        %1777 = vmatmul.mubr.f32.gmra.mxu0 %v1591
        %v1778 = vpop.f32.mrf.mxu0
        %v1779 = vadd.f32 0.0, %v1778
        %v1780 = vpop.f32.mrf.mxu0
        %1781 = vmatprep.mubr.f32.mxu0 0.0
        %1782 = vmatmul.mubr.f32.gmra.mxu0 %v1594
        %v1783 = vpop.f32.mrf.mxu0
        %v1784 = vadd.f32 0.0, %v1783
        %v1785 = vpop.f32.mrf.mxu0
        %1786 = vmatprep.mubr.f32.mxu0 0.0
        %1787 = vmatmul.mubr.f32.gmra.mxu0 %v1597
        %v1788 = vpop.f32.mrf.mxu0
        %v1789 = vadd.f32 0.0, %v1788
        %v1790 = vpop.f32.mrf.mxu0
        %1791 = vmatprep.mubr.f32.mxu0 0.0
        %1792 = vmatmul.mubr.f32.gmra.mxu0 %v1600
        %v1793 = vpop.f32.mrf.mxu0
        %v1794 = vadd.f32 0.0, %v1793
        %v1795 = vpop.f32.mrf.mxu0
        %1796 = vmatprep.mubr.f32.mxu0 0.0
        %1797 = vmatmul.mubr.f32.gmra.mxu0 %v1603
        %v1798 = vpop.f32.mrf.mxu0
        %v1799 = vadd.f32 0.0, %v1798
        %v1800 = vpop.f32.mrf.mxu0
        %1801 = vmatprep.mubr.f32.mxu0 0.0
        %1802 = vmatmul.mubr.f32.gmra.mxu0 %v1606
        %v1803 = vpop.f32.mrf.mxu0
        %v1804 = vadd.f32 0.0, %v1803
        %v1805 = vpop.f32.mrf.mxu0
        %1806 = vmatprep.mubr.f32.mxu0 0.0
        %1807 = vmatmul.mubr.f32.gmra.mxu0 %v1609
        %v1808 = vpop.f32.mrf.mxu0
        %v1809 = vadd.f32 0.0, %v1808
        %v1810 = vpop.f32.mrf.mxu0
        %1811 = vmatprep.mubr.f32.mxu0 0.0
        %1812 = vmatmul.mubr.f32.gmra.mxu0 %v1612
        %v1813 = vpop.f32.mrf.mxu0
        %v1814 = vadd.f32 0.0, %v1813
        %v1815 = vpop.f32.mrf.mxu0
        %1816 = vmatprep.mubr.f32.mxu0 0.0
        %1817 = vmatmul.mubr.f32.gmra.mxu0 %v1615
        %v1818 = vpop.f32.mrf.mxu0
        %v1819 = vadd.f32 0.0, %v1818
        %v1820 = vpop.f32.mrf.mxu0
        %1821 = vmatprep.mubr.f32.mxu0 0.0
        %1822 = vmatmul.mubr.f32.gmra.mxu0 %v1618
        %v1823 = vpop.f32.mrf.mxu0
        %v1824 = vadd.f32 0.0, %v1823
        %v1825 = vpop.f32.mrf.mxu0
        %1826 = vmatprep.mubr.f32.mxu0 0.0
        %1827 = vmatmul.mubr.f32.gmra.mxu0 %v1621
        %v1828 = vpop.f32.mrf.mxu0
        %v1829 = vadd.f32 0.0, %v1828
        %v1830 = vpop.f32.mrf.mxu0
        %1831 = vmatprep.mubr.f32.mxu0 0.0
        %1832 = vmatmul.mubr.f32.gmra.mxu0 %v1624
        %v1833 = vpop.f32.mrf.mxu0
        %v1834 = vadd.f32 0.0, %v1833
        %v1835 = vpop.f32.mrf.mxu0
        %1836 = vmatprep.mubr.f32.mxu0 0.0
        %1837 = vmatmul.mubr.f32.gmra.mxu0 %v1627
        %v1838 = vpop.f32.mrf.mxu0
        %v1839 = vadd.f32 0.0, %v1838
        %v1840 = vpop.f32.mrf.mxu0
        %1841 = vmatprep.mubr.f32.mxu0 0.0
        %1842 = vmatmul.mubr.f32.gmra.mxu0 %v1630
        %v1843 = vpop.f32.mrf.mxu0
        %v1844 = vadd.f32 0.0, %v1843
        %v1845 = vpop.f32.mrf.mxu0
        %1846 = vmatprep.mubr.f32.mxu0 0.0
        %1847 = vmatmul.mubr.f32.gmra.mxu0 %v1633
        %v1848 = vpop.f32.mrf.mxu0
        %v1849 = vadd.f32 0.0, %v1848
        %v1850 = vpop.f32.mrf.mxu0
        %1851 = vmatprep.mubr.f32.mxu0 0.0
        %1852 = vmatmul.mubr.f32.gmra.mxu0 %v1636
        %v1853 = vpop.f32.mrf.mxu0
        %v1854 = vadd.f32 0.0, %v1853
        %v1855 = vpop.f32.mrf.mxu0
        %1856 = vmatprep.mubr.f32.mxu0 0.0
        %1857 = vmatmul.mubr.f32.gmra.mxu0 %v1639
        %v1858 = vpop.f32.mrf.mxu0
        %v1859 = vadd.f32 0.0, %v1858
        %v1860 = vpop.f32.mrf.mxu0
        %1861 = vmatprep.mubr.f32.mxu0 0.0
        %1862 = vmatmul.mubr.f32.gmra.mxu0 %v1642
        %v1863 = vpop.f32.mrf.mxu0
        %v1864 = vadd.f32 0.0, %v1863
        %v1865 = vpop.f32.mrf.mxu0
        %1866 = vmatprep.mubr.f32.mxu0 0.0
        %1867 = vmatmul.mubr.f32.gmra.mxu0 %v1645
        %v1868 = vpop.f32.mrf.mxu0
        %v1869 = vadd.f32 0.0, %v1868
        %v1870 = vpop.f32.mrf.mxu0
        %1871 = vdwg.mxu0
        %v1872 = vld [vmem:[#allocation7] sm:$0xff]
        %v1873 = vld [vmem:[#allocation7 + $0x8] sm:$0xff]
        %1906 = vrot.lane.b32.xlu0 %v1714, 96
        %v1907 = vpop.permute.xlu0 %1906
        %1908 = vrot.lane.b32.xlu0 %v1719, 96
        %v1909 = vpop.permute.xlu0 %1908
        %1910 = vrot.lane.b32.xlu0 %v1724, 96
        %v1911 = vpop.permute.xlu0 %1910
        %1912 = vrot.lane.b32.xlu0 %v1729, 96
        %v1913 = vpop.permute.xlu0 %1912
        %1914 = vrot.lane.b32.xlu0 %v1734, 96
        %v1915 = vpop.permute.xlu0 %1914
        %1916 = vrot.lane.b32.xlu0 %v1739, 96
        %v1917 = vpop.permute.xlu0 %1916
        %1918 = vrot.lane.b32.xlu0 %v1744, 96
        %v1919 = vpop.permute.xlu0 %1918
        %1920 = vrot.lane.b32.xlu0 %v1749, 96
        %v1921 = vpop.permute.xlu0 %1920
        %1922 = vrot.lane.b32.xlu0 %v1754, 96
        %v1923 = vpop.permute.xlu0 %1922
        %1924 = vrot.lane.b32.xlu0 %v1759, 96
        %v1925 = vpop.permute.xlu0 %1924
        %1926 = vrot.lane.b32.xlu0 %v1764, 96
        %v1927 = vpop.permute.xlu0 %1926
        %1928 = vrot.lane.b32.xlu0 %v1769, 96
        %v1929 = vpop.permute.xlu0 %1928
        %1930 = vrot.lane.b32.xlu0 %v1774, 96
        %v1931 = vpop.permute.xlu0 %1930
        %1932 = vrot.lane.b32.xlu0 %v1779, 96
        %v1933 = vpop.permute.xlu0 %1932
        %1934 = vrot.lane.b32.xlu0 %v1784, 96
        %v1935 = vpop.permute.xlu0 %1934
        %1936 = vrot.lane.b32.xlu0 %v1789, 96
        %v1937 = vpop.permute.xlu0 %1936
        %1938 = vrot.lane.b32.xlu0 %v1794, 96
        %v1939 = vpop.permute.xlu0 %1938
        %1940 = vrot.lane.b32.xlu0 %v1799, 96
        %v1941 = vpop.permute.xlu0 %1940
        %1942 = vrot.lane.b32.xlu0 %v1804, 96
        %v1943 = vpop.permute.xlu0 %1942
        %1944 = vrot.lane.b32.xlu0 %v1809, 96
        %v1945 = vpop.permute.xlu0 %1944
        %1946 = vrot.lane.b32.xlu0 %v1814, 96
        %v1947 = vpop.permute.xlu0 %1946
        %1948 = vrot.lane.b32.xlu0 %v1819, 96
        %v1949 = vpop.permute.xlu0 %1948
        %1950 = vrot.lane.b32.xlu0 %v1824, 96
        %v1951 = vpop.permute.xlu0 %1950
        %1952 = vrot.lane.b32.xlu0 %v1829, 96
        %v1953 = vpop.permute.xlu0 %1952
        %1954 = vrot.lane.b32.xlu0 %v1834, 96
        %v1955 = vpop.permute.xlu0 %1954
        %1956 = vrot.lane.b32.xlu0 %v1839, 96
        %v1957 = vpop.permute.xlu0 %1956
        %1958 = vrot.lane.b32.xlu0 %v1844, 96
        %v1959 = vpop.permute.xlu0 %1958
        %1960 = vrot.lane.b32.xlu0 %v1849, 96
        %v1961 = vpop.permute.xlu0 %1960
        %1962 = vrot.lane.b32.xlu0 %v1854, 96
        %v1963 = vpop.permute.xlu0 %1962
        %1964 = vrot.lane.b32.xlu0 %v1859, 96
        %v1965 = vpop.permute.xlu0 %1964
        %1966 = vrot.lane.b32.xlu0 %v1864, 96
        %v1967 = vpop.permute.xlu0 %1966
        %1968 = vrot.lane.b32.xlu0 %v1869, 96
        %v1969 = vpop.permute.xlu0 %1968
        %v2002 = vmul.f32 %v1714, %v1907
        %v2003 = vmul.f32 %v1719, %v1909
        %v2004 = vmul.f32 %v1724, %v1911
        %v2005 = vmul.f32 %v1729, %v1913
        %v2006 = vmul.f32 %v1734, %v1915
        %v2007 = vmul.f32 %v1739, %v1917
        %v2008 = vmul.f32 %v1744, %v1919
        %v2009 = vmul.f32 %v1749, %v1921
        %v2010 = vmul.f32 %v1754, %v1923
        %v2011 = vmul.f32 %v1759, %v1925
        %v2012 = vmul.f32 %v1764, %v1927
        %v2013 = vmul.f32 %v1769, %v1929
        %v2014 = vmul.f32 %v1774, %v1931
        %v2015 = vmul.f32 %v1779, %v1933
        %v2016 = vmul.f32 %v1784, %v1935
        %v2017 = vmul.f32 %v1789, %v1937
        %v2018 = vmul.f32 %v1794, %v1939
        %v2019 = vmul.f32 %v1799, %v1941
        %v2020 = vmul.f32 %v1804, %v1943
        %v2021 = vmul.f32 %v1809, %v1945
        %v2022 = vmul.f32 %v1814, %v1947
        %v2023 = vmul.f32 %v1819, %v1949
        %v2024 = vmul.f32 %v1824, %v1951
        %v2025 = vmul.f32 %v1829, %v1953
        %v2026 = vmul.f32 %v1834, %v1955
        %v2027 = vmul.f32 %v1839, %v1957
        %v2028 = vmul.f32 %v1844, %v1959
        %v2029 = vmul.f32 %v1849, %v1961
        %v2030 = vmul.f32 %v1854, %v1963
        %v2031 = vmul.f32 %v1859, %v1965
        %v2032 = vmul.f32 %v1864, %v1967
        %v2033 = vmul.f32 %v1869, %v1969
        %v2034 = vsel %vm1053, %v2002, 0.0
        %v2035 = vsel %vm1053, %v2004, 0.0
        %v2036 = vadd.f32 %v2034, %v2035
        %v2037 = vsel %vm1053, %v2006, 0.0
        %v2038 = vadd.f32 %v2036, %v2037
        %v2039 = vsel %vm1053, %v2008, 0.0
        %v2040 = vadd.f32 %v2038, %v2039
        %v2041 = vsel %vm1053, %v2010, 0.0
        %v2042 = vadd.f32 %v2040, %v2041
        %v2043 = vsel %vm1053, %v2012, 0.0
        %v2044 = vadd.f32 %v2042, %v2043
        %v2045 = vsel %vm1053, %v2014, 0.0
        %v2046 = vadd.f32 %v2044, %v2045
        %v2047 = vsel %vm1053, %v2016, 0.0
        %v2048 = vadd.f32 %v2046, %v2047
        %v2049 = vsel %vm1053, %v2018, 0.0
        %v2050 = vadd.f32 %v2048, %v2049
        %v2051 = vsel %vm1053, %v2020, 0.0
        %v2052 = vadd.f32 %v2050, %v2051
        %v2053 = vsel %vm1053, %v2022, 0.0
        %v2054 = vadd.f32 %v2052, %v2053
        %v2055 = vsel %vm1053, %v2024, 0.0
        %v2056 = vadd.f32 %v2054, %v2055
        %v2057 = vsel %vm1053, %v2026, 0.0
        %v2058 = vadd.f32 %v2056, %v2057
        %v2059 = vsel %vm1053, %v2028, 0.0
        %v2060 = vadd.f32 %v2058, %v2059
        %v2061 = vsel %vm1053, %v2030, 0.0
        %v2062 = vadd.f32 %v2060, %v2061
        %v2063 = vsel %vm1053, %v2032, 0.0
        %v2064 = vadd.f32 %v2062, %v2063
        %v2065 = vsel %vm1053, %v2003, 0.0
        %v2066 = vsel %vm1053, %v2005, 0.0
        %v2067 = vadd.f32 %v2065, %v2066
        %v2068 = vsel %vm1053, %v2007, 0.0
        %v2069 = vadd.f32 %v2067, %v2068
        %v2070 = vsel %vm1053, %v2009, 0.0
        %v2071 = vadd.f32 %v2069, %v2070
        %v2072 = vsel %vm1053, %v2011, 0.0
        %v2073 = vadd.f32 %v2071, %v2072
        %v2074 = vsel %vm1053, %v2013, 0.0
        %v2075 = vadd.f32 %v2073, %v2074
        %v2076 = vsel %vm1053, %v2015, 0.0
        %v2077 = vadd.f32 %v2075, %v2076
        %v2078 = vsel %vm1053, %v2017, 0.0
        %v2079 = vadd.f32 %v2077, %v2078
        %v2080 = vsel %vm1053, %v2019, 0.0
        %v2081 = vadd.f32 %v2079, %v2080
        %v2082 = vsel %vm1053, %v2021, 0.0
        %v2083 = vadd.f32 %v2081, %v2082
        %v2084 = vsel %vm1053, %v2023, 0.0
        %v2085 = vadd.f32 %v2083, %v2084
        %v2086 = vsel %vm1053, %v2025, 0.0
        %v2087 = vadd.f32 %v2085, %v2086
        %v2088 = vsel %vm1053, %v2027, 0.0
        %v2089 = vadd.f32 %v2087, %v2088
        %v2090 = vsel %vm1053, %v2029, 0.0
        %v2091 = vadd.f32 %v2089, %v2090
        %v2092 = vsel %vm1053, %v2031, 0.0
        %v2093 = vadd.f32 %v2091, %v2092
        %v2094 = vsel %vm1053, %v2033, 0.0
        %v2095 = vadd.f32 %v2093, %v2094
        %v2096 = vadd.f32 %v1872, %v2064
        %v2097 = vadd.f32 %v1873, %v2095
        %2098 = vst.msk [vmem:[#allocation7] sm:$0xff] %vm1053, %v2096
        %2099 = vst.msk [vmem:[#allocation7 + $0x8] sm:$0xff] %vm1053, %v2097
        %v2100 = vld [vmem:[#allocation4] sm:$0xff]
        %v2101 = vld [vmem:[#allocation4 + $0x8] sm:$0xff]
        %2104 = vrot.lane.b32.xlu0 %v2100, 64
        %v2105 = vpop.permute.xlu0 %2104
        %2106 = vrot.lane.b32.xlu0 %v2101, 64
        %v2107 = vpop.permute.xlu0 %2106
        %v2110 = vmul.f32 %v1714, %v2105
        %v2111 = vmul.f32 %v1719, %v2107
        %v2112 = vmul.f32 %v1724, %v2105
        %v2113 = vmul.f32 %v1729, %v2107
        %v2114 = vmul.f32 %v1734, %v2105
        %v2115 = vmul.f32 %v1739, %v2107
        %v2116 = vmul.f32 %v1744, %v2105
        %v2117 = vmul.f32 %v1749, %v2107
        %v2118 = vmul.f32 %v1754, %v2105
        %v2119 = vmul.f32 %v1759, %v2107
        %v2120 = vmul.f32 %v1764, %v2105
        %v2121 = vmul.f32 %v1769, %v2107
        %v2122 = vmul.f32 %v1774, %v2105
        %v2123 = vmul.f32 %v1779, %v2107
        %v2124 = vmul.f32 %v1784, %v2105
        %v2125 = vmul.f32 %v1789, %v2107
        %v2126 = vmul.f32 %v1794, %v2105
        %v2127 = vmul.f32 %v1799, %v2107
        %v2128 = vmul.f32 %v1804, %v2105
        %v2129 = vmul.f32 %v1809, %v2107
        %v2130 = vmul.f32 %v1814, %v2105
        %v2131 = vmul.f32 %v1819, %v2107
        %v2132 = vmul.f32 %v1824, %v2105
        %v2133 = vmul.f32 %v1829, %v2107
        %v2134 = vmul.f32 %v1834, %v2105
        %v2135 = vmul.f32 %v1839, %v2107
        %v2136 = vmul.f32 %v1844, %v2105
        %v2137 = vmul.f32 %v1849, %v2107
        %v2138 = vmul.f32 %v1854, %v2105
        %v2139 = vmul.f32 %v1859, %v2107
        %v2140 = vmul.f32 %v1864, %v2105
        %v2141 = vmul.f32 %v1869, %v2107
        %v2142 = vld [vmem:[#allocation2] sm:$0xff]
        %v2143 = vld [vmem:[#allocation2 + $0x8] sm:$0xff]
        %v2144 = vmul.f32 %v1515, %v2142
        %v2145 = vmul.f32 %v1516, %v2143
        %v2146 = vmul.f32 %v1517, %v2142
        %v2147 = vmul.f32 %v1518, %v2143
        %v2148 = vmul.f32 %v1519, %v2142
        %v2149 = vmul.f32 %v1520, %v2143
        %v2150 = vmul.f32 %v1521, %v2142
        %v2151 = vmul.f32 %v1522, %v2143
        %v2152 = vmul.f32 %v1523, %v2142
        %v2153 = vmul.f32 %v1524, %v2143
        %v2154 = vmul.f32 %v1525, %v2142
        %v2155 = vmul.f32 %v1526, %v2143
        %v2156 = vmul.f32 %v1527, %v2142
        %v2157 = vmul.f32 %v1528, %v2143
        %v2158 = vmul.f32 %v1529, %v2142
        %v2159 = vmul.f32 %v1530, %v2143
        %v2160 = vmul.f32 %v1531, %v2142
        %v2161 = vmul.f32 %v1532, %v2143
        %v2162 = vmul.f32 %v1533, %v2142
        %v2163 = vmul.f32 %v1534, %v2143
        %v2164 = vmul.f32 %v1535, %v2142
        %v2165 = vmul.f32 %v1536, %v2143
        %v2166 = vmul.f32 %v1537, %v2142
        %v2167 = vmul.f32 %v1538, %v2143
        %v2168 = vmul.f32 %v1539, %v2142
        %v2169 = vmul.f32 %v1540, %v2143
        %v2170 = vmul.f32 %v1541, %v2142
        %v2171 = vmul.f32 %v1542, %v2143
        %v2172 = vmul.f32 %v1543, %v2142
        %v2173 = vmul.f32 %v1544, %v2143
        %v2174 = vmul.f32 %v1545, %v2142
        %v2175 = vmul.f32 %v1546, %v2143
        %2208 = vrot.lane.b32.xlu0 %v2144, 64
        %v2209 = vpop.permute.xlu0 %2208
        %2210 = vrot.lane.b32.xlu0 %v2145, 64
        %v2211 = vpop.permute.xlu0 %2210
        %2212 = vrot.lane.b32.xlu0 %v2146, 64
        %v2213 = vpop.permute.xlu0 %2212
        %2214 = vrot.lane.b32.xlu0 %v2147, 64
        %v2215 = vpop.permute.xlu0 %2214
        %2216 = vrot.lane.b32.xlu0 %v2148, 64
        %v2217 = vpop.permute.xlu0 %2216
        %2218 = vrot.lane.b32.xlu0 %v2149, 64
        %v2219 = vpop.permute.xlu0 %2218
        %2220 = vrot.lane.b32.xlu0 %v2150, 64
        %v2221 = vpop.permute.xlu0 %2220
        %2222 = vrot.lane.b32.xlu0 %v2151, 64
        %v2223 = vpop.permute.xlu0 %2222
        %2224 = vrot.lane.b32.xlu0 %v2152, 64
        %v2225 = vpop.permute.xlu0 %2224
        %2226 = vrot.lane.b32.xlu0 %v2153, 64
        %v2227 = vpop.permute.xlu0 %2226
        %2228 = vrot.lane.b32.xlu0 %v2154, 64
        %v2229 = vpop.permute.xlu0 %2228
        %2230 = vrot.lane.b32.xlu0 %v2155, 64
        %v2231 = vpop.permute.xlu0 %2230
        %2232 = vrot.lane.b32.xlu0 %v2156, 64
        %v2233 = vpop.permute.xlu0 %2232
        %2234 = vrot.lane.b32.xlu0 %v2157, 64
        %v2235 = vpop.permute.xlu0 %2234
        %2236 = vrot.lane.b32.xlu0 %v2158, 64
        %v2237 = vpop.permute.xlu0 %2236
        %2238 = vrot.lane.b32.xlu0 %v2159, 64
        %v2239 = vpop.permute.xlu0 %2238
        %2240 = vrot.lane.b32.xlu0 %v2160, 64
        %v2241 = vpop.permute.xlu0 %2240
        %2242 = vrot.lane.b32.xlu0 %v2161, 64
        %v2243 = vpop.permute.xlu0 %2242
        %2244 = vrot.lane.b32.xlu0 %v2162, 64
        %v2245 = vpop.permute.xlu0 %2244
        %2246 = vrot.lane.b32.xlu0 %v2163, 64
        %v2247 = vpop.permute.xlu0 %2246
        %2248 = vrot.lane.b32.xlu0 %v2164, 64
        %v2249 = vpop.permute.xlu0 %2248
        %2250 = vrot.lane.b32.xlu0 %v2165, 64
        %v2251 = vpop.permute.xlu0 %2250
        %2252 = vrot.lane.b32.xlu0 %v2166, 64
        %v2253 = vpop.permute.xlu0 %2252
        %2254 = vrot.lane.b32.xlu0 %v2167, 64
        %v2255 = vpop.permute.xlu0 %2254
        %2256 = vrot.lane.b32.xlu0 %v2168, 64
        %v2257 = vpop.permute.xlu0 %2256
        %2258 = vrot.lane.b32.xlu0 %v2169, 64
        %v2259 = vpop.permute.xlu0 %2258
        %2260 = vrot.lane.b32.xlu0 %v2170, 64
        %v2261 = vpop.permute.xlu0 %2260
        %2262 = vrot.lane.b32.xlu0 %v2171, 64
        %v2263 = vpop.permute.xlu0 %2262
        %2264 = vrot.lane.b32.xlu0 %v2172, 64
        %v2265 = vpop.permute.xlu0 %2264
        %2266 = vrot.lane.b32.xlu0 %v2173, 64
        %v2267 = vpop.permute.xlu0 %2266
        %2268 = vrot.lane.b32.xlu0 %v2174, 64
        %v2269 = vpop.permute.xlu0 %2268
        %2270 = vrot.lane.b32.xlu0 %v2175, 64
        %v2271 = vpop.permute.xlu0 %2270
        %v2304 = vadd.f32 %v2110, %v2209
        %v2305 = vadd.f32 %v2111, %v2211
        %v2306 = vadd.f32 %v2112, %v2213
        %v2307 = vadd.f32 %v2113, %v2215
        %v2308 = vadd.f32 %v2114, %v2217
        %v2309 = vadd.f32 %v2115, %v2219
        %v2310 = vadd.f32 %v2116, %v2221
        %v2311 = vadd.f32 %v2117, %v2223
        %v2312 = vadd.f32 %v2118, %v2225
        %v2313 = vadd.f32 %v2119, %v2227
        %v2314 = vadd.f32 %v2120, %v2229
        %v2315 = vadd.f32 %v2121, %v2231
        %v2316 = vadd.f32 %v2122, %v2233
        %v2317 = vadd.f32 %v2123, %v2235
        %v2318 = vadd.f32 %v2124, %v2237
        %v2319 = vadd.f32 %v2125, %v2239
        %v2320 = vadd.f32 %v2126, %v2241
        %v2321 = vadd.f32 %v2127, %v2243
        %v2322 = vadd.f32 %v2128, %v2245
        %v2323 = vadd.f32 %v2129, %v2247
        %v2324 = vadd.f32 %v2130, %v2249
        %v2325 = vadd.f32 %v2131, %v2251
        %v2326 = vadd.f32 %v2132, %v2253
        %v2327 = vadd.f32 %v2133, %v2255
        %v2328 = vadd.f32 %v2134, %v2257
        %v2329 = vadd.f32 %v2135, %v2259
        %v2330 = vadd.f32 %v2136, %v2261
        %v2331 = vadd.f32 %v2137, %v2263
        %v2332 = vadd.f32 %v2138, %v2265
        %v2333 = vadd.f32 %v2139, %v2267
        %v2334 = vadd.f32 %v2140, %v2269
        %v2335 = vadd.f32 %v2141, %v2271
        %v2336 = vld [vmem:[#allocation3] sm:$0xff]
        %v2337 = vld [vmem:[#allocation3 + $0x8] sm:$0xff]
        %2340 = vrot.lane.b32.xlu0 %v2336, 64
        %v2341 = vpop.permute.xlu0 %2340
        %2342 = vrot.lane.b32.xlu0 %v2337, 64
        %v2343 = vpop.permute.xlu0 %2342
        %v2346 = vadd.f32 %v2304, %v2341
        %v2347 = vadd.f32 %v2305, %v2343
        %v2348 = vadd.f32 %v2306, %v2341
        %v2349 = vadd.f32 %v2307, %v2343
        %v2350 = vadd.f32 %v2308, %v2341
        %v2351 = vadd.f32 %v2309, %v2343
        %v2352 = vadd.f32 %v2310, %v2341
        %v2353 = vadd.f32 %v2311, %v2343
        %v2354 = vadd.f32 %v2312, %v2341
        %v2355 = vadd.f32 %v2313, %v2343
        %v2356 = vadd.f32 %v2314, %v2341
        %v2357 = vadd.f32 %v2315, %v2343
        %v2358 = vadd.f32 %v2316, %v2341
        %v2359 = vadd.f32 %v2317, %v2343
        %v2360 = vadd.f32 %v2318, %v2341
        %v2361 = vadd.f32 %v2319, %v2343
        %v2362 = vadd.f32 %v2320, %v2341
        %v2363 = vadd.f32 %v2321, %v2343
        %v2364 = vadd.f32 %v2322, %v2341
        %v2365 = vadd.f32 %v2323, %v2343
        %v2366 = vadd.f32 %v2324, %v2341
        %v2367 = vadd.f32 %v2325, %v2343
        %v2368 = vadd.f32 %v2326, %v2341
        %v2369 = vadd.f32 %v2327, %v2343
        %v2370 = vadd.f32 %v2328, %v2341
        %v2371 = vadd.f32 %v2329, %v2343
        %v2372 = vadd.f32 %v2330, %v2341
        %v2373 = vadd.f32 %v2331, %v2343
        %v2374 = vadd.f32 %v2332, %v2341
        %v2375 = vadd.f32 %v2333, %v2343
        %v2376 = vadd.f32 %v2334, %v2341
        %v2377 = vadd.f32 %v2335, %v2343
        %2410 = vrot.lane.b32.xlu0 %v2346, 64
        %v2411 = vpop.permute.xlu0 %2410
        %2412 = vrot.lane.b32.xlu0 %v2347, 64
        %v2413 = vpop.permute.xlu0 %2412
        %2414 = vrot.lane.b32.xlu0 %v2348, 64
        %v2415 = vpop.permute.xlu0 %2414
        %2416 = vrot.lane.b32.xlu0 %v2349, 64
        %v2417 = vpop.permute.xlu0 %2416
        %2418 = vrot.lane.b32.xlu0 %v2350, 64
        %v2419 = vpop.permute.xlu0 %2418
        %2420 = vrot.lane.b32.xlu0 %v2351, 64
        %v2421 = vpop.permute.xlu0 %2420
        %2422 = vrot.lane.b32.xlu0 %v2352, 64
        %v2423 = vpop.permute.xlu0 %2422
        %2424 = vrot.lane.b32.xlu0 %v2353, 64
        %v2425 = vpop.permute.xlu0 %2424
        %2426 = vrot.lane.b32.xlu0 %v2354, 64
        %v2427 = vpop.permute.xlu0 %2426
        %2428 = vrot.lane.b32.xlu0 %v2355, 64
        %v2429 = vpop.permute.xlu0 %2428
        %2430 = vrot.lane.b32.xlu0 %v2356, 64
        %v2431 = vpop.permute.xlu0 %2430
        %2432 = vrot.lane.b32.xlu0 %v2357, 64
        %v2433 = vpop.permute.xlu0 %2432
        %2434 = vrot.lane.b32.xlu0 %v2358, 64
        %v2435 = vpop.permute.xlu0 %2434
        %2436 = vrot.lane.b32.xlu0 %v2359, 64
        %v2437 = vpop.permute.xlu0 %2436
        %2438 = vrot.lane.b32.xlu0 %v2360, 64
        %v2439 = vpop.permute.xlu0 %2438
        %2440 = vrot.lane.b32.xlu0 %v2361, 64
        %v2441 = vpop.permute.xlu0 %2440
        %2442 = vrot.lane.b32.xlu0 %v2362, 64
        %v2443 = vpop.permute.xlu0 %2442
        %2444 = vrot.lane.b32.xlu0 %v2363, 64
        %v2445 = vpop.permute.xlu0 %2444
        %2446 = vrot.lane.b32.xlu0 %v2364, 64
        %v2447 = vpop.permute.xlu0 %2446
        %2448 = vrot.lane.b32.xlu0 %v2365, 64
        %v2449 = vpop.permute.xlu0 %2448
        %2450 = vrot.lane.b32.xlu0 %v2366, 64
        %v2451 = vpop.permute.xlu0 %2450
        %2452 = vrot.lane.b32.xlu0 %v2367, 64
        %v2453 = vpop.permute.xlu0 %2452
        %2454 = vrot.lane.b32.xlu0 %v2368, 64
        %v2455 = vpop.permute.xlu0 %2454
        %2456 = vrot.lane.b32.xlu0 %v2369, 64
        %v2457 = vpop.permute.xlu0 %2456
        %2458 = vrot.lane.b32.xlu0 %v2370, 64
        %v2459 = vpop.permute.xlu0 %2458
        %2460 = vrot.lane.b32.xlu0 %v2371, 64
        %v2461 = vpop.permute.xlu0 %2460
        %2462 = vrot.lane.b32.xlu0 %v2372, 64
        %v2463 = vpop.permute.xlu0 %2462
        %2464 = vrot.lane.b32.xlu0 %v2373, 64
        %v2465 = vpop.permute.xlu0 %2464
        %2466 = vrot.lane.b32.xlu0 %v2374, 64
        %v2467 = vpop.permute.xlu0 %2466
        %2468 = vrot.lane.b32.xlu0 %v2375, 64
        %v2469 = vpop.permute.xlu0 %2468
        %2470 = vrot.lane.b32.xlu0 %v2376, 64
        %v2471 = vpop.permute.xlu0 %2470
        %2472 = vrot.lane.b32.xlu0 %v2377, 64
        %v2473 = vpop.permute.xlu0 %2472
        %2506 = vst.msk [vmem:[%s571] sm:$0xff] %vm1053, %v2411
        %2507 = vst.msk [vmem:[%s571 + $0x8] sm:$0xff] %vm1053, %v2413
        %2508 = vst.msk [vmem:[%s571 + $0x10] sm:$0xff] %vm1053, %v2415
        %2509 = vst.msk [vmem:[%s571 + $0x18] sm:$0xff] %vm1053, %v2417
        %2510 = vst.msk [vmem:[%s571 + $0x20] sm:$0xff] %vm1053, %v2419
        %2511 = vst.msk [vmem:[%s571 + $0x28] sm:$0xff] %vm1053, %v2421
        %2512 = vst.msk [vmem:[%s571 + $0x30] sm:$0xff] %vm1053, %v2423
        %2513 = vst.msk [vmem:[%s571 + $0x38] sm:$0xff] %vm1053, %v2425
        %2514 = vst.msk [vmem:[%s571 + $0x40] sm:$0xff] %vm1053, %v2427
        %2515 = vst.msk [vmem:[%s571 + $0x48] sm:$0xff] %vm1053, %v2429
        %2516 = vst.msk [vmem:[%s571 + $0x50] sm:$0xff] %vm1053, %v2431
        %2517 = vst.msk [vmem:[%s571 + $0x58] sm:$0xff] %vm1053, %v2433
        %2518 = vst.msk [vmem:[%s571 + $0x60] sm:$0xff] %vm1053, %v2435
        %2519 = vst.msk [vmem:[%s571 + $0x68] sm:$0xff] %vm1053, %v2437
        %2520 = vst.msk [vmem:[%s571 + $0x70] sm:$0xff] %vm1053, %v2439
        %2521 = vst.msk [vmem:[%s571 + $0x78] sm:$0xff] %vm1053, %v2441
        %2522 = vst.msk [vmem:[%s571 + $0x80] sm:$0xff] %vm1053, %v2443
        %2523 = vst.msk [vmem:[%s571 + $0x88] sm:$0xff] %vm1053, %v2445
        %2524 = vst.msk [vmem:[%s571 + $0x90] sm:$0xff] %vm1053, %v2447
        %2525 = vst.msk [vmem:[%s571 + $0x98] sm:$0xff] %vm1053, %v2449
        %2526 = vst.msk [vmem:[%s571 + $0xa0] sm:$0xff] %vm1053, %v2451
        %2527 = vst.msk [vmem:[%s571 + $0xa8] sm:$0xff] %vm1053, %v2453
        %2528 = vst.msk [vmem:[%s571 + $0xb0] sm:$0xff] %vm1053, %v2455
        %2529 = vst.msk [vmem:[%s571 + $0xb8] sm:$0xff] %vm1053, %v2457
        %2530 = vst.msk [vmem:[%s571 + $0xc0] sm:$0xff] %vm1053, %v2459
        %2531 = vst.msk [vmem:[%s571 + $0xc8] sm:$0xff] %vm1053, %v2461
        %2532 = vst.msk [vmem:[%s571 + $0xd0] sm:$0xff] %vm1053, %v2463
        %2533 = vst.msk [vmem:[%s571 + $0xd8] sm:$0xff] %vm1053, %v2465
        %2534 = vst.msk [vmem:[%s571 + $0xe0] sm:$0xff] %vm1053, %v2467
        %2535 = vst.msk [vmem:[%s571 + $0xe8] sm:$0xff] %vm1053, %v2469
        %2536 = vst.msk [vmem:[%s571 + $0xf0] sm:$0xff] %vm1053, %v2471
        %2537 = vst.msk [vmem:[%s571 + $0xf8] sm:$0xff] %vm1053, %v2473
        %v2538 = vld [vmem:[#allocation7] sm:$0xff]
        %v2539 = vld [vmem:[#allocation7 + $0x8] sm:$0xff]
        %v2540 = vld [vmem:[#allocation5] sm:$0xff]
        %v2541 = vld [vmem:[#allocation5 + $0x8] sm:$0xff]
        %v2542 = vmul.f32 %v2538, %v2540
        %v2543 = vmul.f32 %v2539, %v2541
        %v2544 = vld [vmem:[#allocation6] sm:$0xff]
        %v2545 = vld [vmem:[#allocation6 + $0x8] sm:$0xff]
        %v2546 = vadd.f32 %v2542, %v2544
        %v2547 = vadd.f32 %v2543, %v2545
        %2548 = vst.msk [vmem:[%s564] sm:$0xff] %vm1053, %v2546
        %2549 = vst.msk [vmem:[%s564 + $0x8] sm:$0xff] %vm1053, %v2547
        %s2550 = sand.u32 %s301, 1
        %s2551 = scalar_lea.sflag [#allocation10], %s2550
        %s2552 = sand.u32 %s301, 1
        %s2553 = smul.addr %s2552, 16
        %s2554 = scalar_lea.vmem [#allocation20], %s2553
        %s2555 = sand.u32 %s329, 1
        %s2556 = scalar_lea.sflag [#allocation22], %s2555
        %s2557 = sand.u32 %s329, 1
        %s2558 = smul.addr %s2557, 256
        %s2559 = scalar_lea.vmem [#allocation21], %s2558
        // Predicated region
        $region97: #{tpu_custom_call.1} parent=63 // pred_check
          %p2560 = pneg %p311
        $region98: #{tpu_custom_call.1} parent=63 // pred_check_branch
          %2562 = sbr.rel (%p2560) target = $region100
        $region99: #{tpu_custom_call.1} parent=63 // pred_region
          %s2564 = ssub.s32 256, 256
          %2565 = vsyncadd %s2551, %s2564
          %s2566 = smul.addr %s42, 2
          %s2567 = smul.addr %s2566, 128
          %s2568 = scalar_lea.hbm %s11, %s2567
          %s2569 = sshll.u32 %s2554, 4
          %s2570 = int_to_ptr.vmem [resolvable:$true] %s2569
          %2575 = dma.vmem_to_hbm [thread:$0]  %s2570, 256, %s2568, %s2551, 128, 128, 8
        $region100: #{tpu_custom_call.1} parent=63 // pred_fallthru
          _
        // Predicated region
        $region101: #{tpu_custom_call.1} parent=63 // pred_check
          %p2576 = pneg %p339
        $region102: #{tpu_custom_call.1} parent=63 // pred_check_branch
          %2578 = sbr.rel (%p2576) target = $region104
        $region103: #{tpu_custom_call.1} parent=63 // pred_region
          %s2579 = smul.u32 16, %s43
          %s2581 = ssub.s32 4096, 4096
          %2582 = vsyncadd %s2556, %s2581
          %s2583 = smul.addr %s2579, 2
          %s2584 = smul.addr %s42, 32
          %s2585 = sadd.s32 %s2583, %s2584
          %s2586 = smul.addr %s2585, 128
          %s2587 = scalar_lea.hbm %s12, %s2586
          %s2588 = sshll.u32 %s2559, 4
          %s2589 = int_to_ptr.vmem [resolvable:$true] %s2588
          %2594 = dma.vmem_to_hbm [thread:$0]  %s2589, 4096, %s2587, %s2556, 128, 128, 8
        $region104: #{tpu_custom_call.1} parent=63 // pred_fallthru
          _
      $region64: #{tpu_custom_call.1} parent=5 // pred_fallthru
        _
      %p2595 = scmp.le.s32.totalorder 2, %s33
      // Predicated region
      $region105: #{tpu_custom_call.1} parent=5 // pred_check
        %p2596 = pneg %p2595
      $region106: #{tpu_custom_call.1} parent=5 // pred_check_branch
        %2598 = sbr.rel (%p2596) target = $region108
      $region107: #{tpu_custom_call.1} parent=5 // pred_region
        %s2599 = ssub.s32 %s33, 2
        // Predicated region
        $region109: #{tpu_custom_call.1} parent=107 // pred_check
          %p2600 = pneg %p317
        $region110: #{tpu_custom_call.1} parent=107 // pred_check_branch
          %2602 = sbr.rel (%p2600) target = $region112
        $region111: #{tpu_custom_call.1} parent=107 // pred_region
          %s2603 = sand.u32 %s302, 1
          %s2604 = scalar_lea.sflag [#allocation10], %s2603
          %s2605 = sand.u32 %s302, 1
          %s2606 = smul.addr %s2605, 16
          %s2607 = scalar_lea.vmem [#allocation20], %s2606
          %2608 = dma.done %s2604, 256
        $region112: #{tpu_custom_call.1} parent=107 // pred_fallthru
          _
        // Predicated region
        $region113: #{tpu_custom_call.1} parent=107 // pred_check
          %p2609 = pneg %p345
        $region114: #{tpu_custom_call.1} parent=107 // pred_check_branch
          %2611 = sbr.rel (%p2609) target = $region116
        $region115: #{tpu_custom_call.1} parent=107 // pred_region
          %s2612 = sand.u32 %s330, 1
          %s2613 = scalar_lea.sflag [#allocation22], %s2612
          %s2614 = sand.u32 %s330, 1
          %s2615 = smul.addr %s2614, 256
          %s2616 = scalar_lea.vmem [#allocation21], %s2615
          %2617 = dma.done %s2613, 4096
        $region116: #{tpu_custom_call.1} parent=107 // pred_fallthru
          _
      $region108: #{tpu_custom_call.1} parent=5 // pred_fallthru
        _
    $region6: #{tpu_custom_call.1} parent=1 // loop_footer
      %s37 = sadd.s32 1, %s33
    $region7: #{tpu_custom_call.1} parent=1 // loop_footer_branch
      %32 = sbr.rel target = $region3
    $region8: #{tpu_custom_call.1} parent=1 // loop_exit
      _
    %2618 = vsyncpa [#allocation9], 1
    %s2619 = scalar_lea.sflag [#allocation9], 1
    %2620 = vsyncpa %s2619, 1
    %2621 = vsyncpa [#allocation12], 1
    %s2622 = scalar_lea.sflag [#allocation12], 1
    %2623 = vsyncpa %s2622, 1
    %2624 = vsyncpa [#allocation15], 1
    %2625 = vsyncpa [#allocation18], 1
    %2626 = vsyncpa [#allocation10], 1
    %s2627 = scalar_lea.sflag [#allocation10], 1
    %2628 = vsyncpa %s2627, 1
    %2629 = vsyncpa [#allocation22], 1
    %s2630 = scalar_lea.sflag [#allocation22], 1
    %2631 = vsyncpa %s2630, 1

</llo_original>
